<compile_context>
chip_gen: v6e
topology: v6e:2x2x1
jax: 0.10.0
libtpu: 0.0.40
codegen_flags: <defaults>
</compile_context>

<pallas_src>
import jax
import jax.numpy as jnp
from jax.experimental import pallas as pl
from jax.experimental.pallas import tpu as pltpu

EPS = 1e-5


# ---------------- pallas_call helper: single-block, all operands in VMEM ----------------

def _vmem_call(kernel, out_shapes, *args):
    """Single-block pallas_call; every (small) operand resident in VMEM. Returns a tuple."""
    return pl.pallas_call(
        kernel,
        out_shape=tuple(jax.ShapeDtypeStruct(s, jnp.float32) for s in out_shapes),
        in_specs=[pl.BlockSpec(memory_space=pltpu.MemorySpace.VMEM)] * len(args),
        out_specs=tuple(pl.BlockSpec(memory_space=pltpu.MemorySpace.VMEM)
                        for _ in out_shapes),
    )(*args)


# ---------------- host-side layout plumbing (im2col patch extraction) ----------------

def _conv1_corner_patches(x, Hp, Wp):
    """x: (B, 6, H, W) NCHW -> (4*B, 54, Hp*Wp) patches.

    Corner-major then batch; patch dim ordered (cin, kh, kw) to match
    conv1_w.reshape(16, 54).  Corner k of pooled cell (hp, wp) is the conv1
    output at (2*hp+dy, 2*wp+dx), i.e. input window start (4*hp+2*dy, 4*wp+2*dx).
    """
    B = x.shape[0]
    corners = []
    for dy in range(2):
        for dx in range(2):
            slices = []
            for i in range(3):
                for j in range(3):
                    r0 = 2 * dy + i
                    c0 = 2 * dx + j
                    slices.append(x[:, :, r0:r0 + 4 * (Hp - 1) + 1:4,
                                          c0:c0 + 4 * (Wp - 1) + 1:4])   # (B, 6, Hp, Wp)
            p = jnp.stack(slices, axis=2)                                # (B, 6, 9, Hp, Wp)
            corners.append(p.reshape(B, 54, Hp * Wp))
    return jnp.stack(corners, axis=0).reshape(4 * B, 54, Hp * Wp)


def _conv2_patches(pooled, H2, W2):
    """pooled: (B, 16, Hp, Wp) NCHW -> (B, 144, H2*W2); patch dim ordered (cin, kh, kw)."""
    slices = []
    for i in range(3):
        for j in range(3):
            slices.append(pooled[:, :, i:i + 2 * (H2 - 1) + 1:2,
                                       j:j + 2 * (W2 - 1) + 1:2])        # (B, 16, H2, W2)
    p = jnp.stack(slices, axis=2)                                        # (B, 16, 9, H2, W2)
    B = pooled.shape[0]
    return p.reshape(B, 144, H2 * W2)


# ---------------- parameters (PyTorch-style init) ----------------

def init_params(key):
    ks = jax.random.split(key, 10)

    def w(k, shape, fan_in):
        bound = 1.0 / (fan_in ** 0.5)
        return jax.random.uniform(k, shape, jnp.float32, -bound, bound)

    return {
        'conv1_w': w(ks[0], (16, 6, 3, 3), 6 * 9),
        'conv1_b': w(ks[1], (16,), 6 * 9),
        'conv2_w': w(ks[2], (32, 16, 3, 3), 16 * 9),
        'conv2_b': w(ks[3], (32,), 16 * 9),
        'Cv1_w':   w(ks[4], (32, 32, 1, 1), 32),
        'Cv1_b':   w(ks[5], (32,), 32),
        'cv2_w':   w(ks[6], (8, 32, 1, 1), 32),
        'cv2_b':   w(ks[7], (8,), 32),
        'cv3_w':   w(ks[8], (8, 32, 1, 1), 32),
        'cv3_b':   w(ks[9], (8,), 32),
        'bn1_g': jnp.ones((16,), jnp.float32),  'bn1_b': jnp.zeros((16,), jnp.float32),
        'bn2_g': jnp.ones((32,), jnp.float32),  'bn2_b': jnp.zeros((32,), jnp.float32),
    }


# ---------------- forward ----------------

def self_attention_forward(under, over, params):
    B, _, H, W = under.shape
    x = jnp.concatenate([under, over], axis=1)                 # (B, 6, H, W)

    H1, W1 = (H - 3) // 2 + 1, (W - 3) // 2 + 1
    if (H1 % 2) or (W1 % 2):
        # TODO(synk): odd conv1 output dims need the leftover (unpooled) rows folded into
        # the BN1 batch statistics before the fused conv1+maxpool path is valid.
        raise NotImplementedError("fused conv1+maxpool path requires even conv1 output dims")
    Hp, Wp = H1 // 2, W1 // 2
    Mp = Hp * Wp
    H2, W2 = (Hp - 3) // 2 + 1, (Wp - 3) // 2 + 1
    S = H2 * W2
    N = B * S

    # weights in channel-major matmul form; BN/bias operands packed (fewer DMAs).
    w1 = params['conv1_w'].reshape(16, 54)
    bnp1 = jnp.stack([params['conv1_b'], params['bn1_g'], params['bn1_b']]).reshape(3, 16, 1)
    w2 = params['conv2_w'].reshape(32, 144)
    bnp2 = jnp.stack([params['conv2_b'], params['bn2_g'], params['bn2_b']]).reshape(3, 32, 1)
    w48 = jnp.concatenate([params['Cv1_w'].reshape(32, 32),
                           params['cv2_w'].reshape(8, 32),
                           params['cv3_w'].reshape(8, 32)], axis=0)          # (48, 32)
    b48 = jnp.concatenate([params['Cv1_b'], params['cv2_b'],
                           params['cv3_b']]).reshape(48, 1)

    # ---- Kernel A: conv1 + BN1 (batch stats) + ReLU + 2x2/s2 maxpool, fused ----
    def conv1_pool_kernel(p_ref, w_ref, bn_ref, o_ref):
        wmat = w_ref[...]                       # (16, 54)
        bias, gamma, beta = bn_ref[0], bn_ref[1], bn_ref[2]   # (16, 1) each
        ys = []
        s = jnp.zeros((16, 1), jnp.float32)
        for kb in range(4 * B):                 # 4 pool corners x B batches
            y = jnp.dot(wmat, p_ref[kb], preferred_element_type=jnp.float32) + bias
            ys.append(y)                        # (16, Mp), channel-major
            s = s + jnp.sum(y, axis=1, keepdims=True)
        cnt = float(4 * B * Mp)                 # = B * H1 * W1 (all conv1 outputs)
        mean = s * (1.0 / cnt)
        sq = jnp.zeros((16, 1), jnp.float32)
        for y in ys:
            d = y - mean
            sq = sq + jnp.sum(d * d, axis=1, keepdims=True)
        inv = jax.lax.rsqrt(sq * (1.0 / cnt) + EPS)
        scale = gamma * inv
        shift = beta - mean * scale
        for b in range(B):
            z = [jnp.maximum(ys[k * B + b] * scale + shift, 0.0) for k in range(4)]
            o_ref[b] = jnp.maximum(jnp.maximum(z[0], z[1]), jnp.maximum(z[2], z[3]))

    p1 = _conv1_corner_patches(x, Hp, Wp)                      # (4*B, 54, Mp)
    (pooled,) = _vmem_call(conv1_pool_kernel, [(B, 16, Mp)], p1, w1, bnp1)
    pooled = pooled.reshape(B, 16, Hp, Wp)                     # NCHW (free reshape)

    # ---- Kernel B: conv2 + BN2 + ReLU + fused 1x1 projections (Cv1 | cv2 | cv3) ----
    def conv2_proj_kernel(p_ref, w2_ref, bn_ref, w48_ref, b48_ref,
                          oC_ref, oc1_ref, oc2_ref):
        wmat = w2_ref[...]                      # (32, 144)
        bias, gamma, beta = bn_ref[0], bn_ref[1], bn_ref[2]    # (32, 1) each
        wproj = w48_ref[...]                    # (48, 32)
        bproj = b48_ref[...]                    # (48, 1)
        ys = []
        s = jnp.zeros((32, 1), jnp.float32)
        for b in range(B):
            y = jnp.dot(wmat, p_ref[b], preferred_element_type=jnp.float32) + bias
            ys.append(y)                        # (32, S), channel-major
            s = s + jnp.sum(y, axis=1, keepdims=True)
        cnt = float(B * S)
        mean = s * (1.0 / cnt)
        sq = jnp.zeros((32, 1), jnp.float32)
        for y in ys:
            d = y - mean
            sq = sq + jnp.sum(d * d, axis=1, keepdims=True)
        inv = jax.lax.rsqrt(sq * (1.0 / cnt) + EPS)
        scale = gamma * inv
        shift = beta - mean * scale
        for b in range(B):
            feat = jnp.maximum(ys[b] * scale + shift, 0.0)     # (32, S)
            proj = jnp.dot(wproj, feat, preferred_element_type=jnp.float32) + bproj  # (48, S)
            oC_ref[b] = proj[0:32]              # Cv1 -> NCHW channel-major
            oc1_ref[b] = proj[32:40]            # cv2
            oc2_ref[b] = proj[40:48]            # cv3

    p2 = _conv2_patches(pooled, H2, W2)                        # (B, 144, S)
    Cq, c1q, c2q = _vmem_call(conv2_proj_kernel,
                              [(B, 32, S), (B, 8, S), (B, 8, S)],
                              p2, w2, bnp2, w48, b48)

    # PyTorch's .view()s of NCHW-contiguous buffers are now plain row-major reshapes (free).
    C_mat = Cq.reshape(B * 32, S)              # C.view(B*32, H2*W2)
    c1_v = c1q.reshape(N, 8)                   # c1.view(B*H2*W2, 8)
    c2_v = c2q.reshape(N, 8)                   # c2.view(B*H2*W2, 8)   (transposed in-kernel)

    # ---- Kernel C: scores -> softmax -> attention matmul; (N, N) stays in VMEM ----
    def attention_kernel(c1_ref, c2_ref, cm_ref, o_ref):
        scores = jnp.dot(c1_ref[...], c2_ref[...].T,
                         preferred_element_type=jnp.float32)   # (N, N)
        m = jnp.max(scores, axis=1, keepdims=True)
        e = jnp.exp(scores - m)
        a = e * pl.reciprocal(jnp.sum(e, axis=1, keepdims=True), approx=True)
        cm = cm_ref[...]                                       # (B*32, S)
        # attention_map[i, r*B + p] = sum_s C[i, s] * A[r, p*S + s]
        for p in range(B):
            o_ref[p] = jnp.dot(cm, a[:, p * S:(p + 1) * S].T,
                               preferred_element_type=jnp.float32)   # (B*32, N)

    (att_blocks,) = _vmem_call(attention_kernel, [(B, B * 32, N)], c1_v, c2_v, C_mat)
    # att_blocks[p, i, r] == attention_map[i, r*B + p] of the PyTorch (B*32, B*N) matrix.

    # F.interpolate(size=[H, W], mode='nearest') fused with the block-layout gather:
    # attention_map.view(B, 32, H2*B, W2*B)[bb, c, y, x] = att_blocks[x % B,
    #                                                                 bb*32 + c,
    #                                                                 y*W2 + x // B]
    hin, win = H2 * B, W2 * B
    hi = (jnp.arange(H) * hin) // H                            # nearest source row
    wi = (jnp.arange(W) * win) // W                            # nearest source col
    idx_p = (wi % B)[None, None, :]                            # (1, 1, W)
    idx_c = jnp.arange(B * 32)[:, None, None]                  # (B*32, 1, 1)
    idx_r = ((hi * W2)[:, None] + (wi // B)[None, :])[None, :, :]   # (1, H, W)
    att = att_blocks[idx_p, idx_c, idx_r]                      # (B*32, H, W)
    return att.reshape(B, 32, H, W)


if __name__ == "__main__":
    key = jax.random.PRNGKey(0)
    kp, ku, ko = jax.random.split(key, 3)
    params = init_params(kp)

    B, H, W = 2, 38, 38          # -> conv1: 18x18, maxpool: 9x9, conv2: 4x4
    under = jax.random.normal(ku, (B, 3, H, W), jnp.float32)
    over = jax.random.normal(ko, (B, 3, H, W), jnp.float32)

    fwd = jax.jit(lambda u, o: self_attention_forward(u, o, params))
    out = jax.block_until_ready(fwd(under, over))
    assert out.shape == (B, 32, H, W), out.shape
    assert bool(jnp.all(jnp.isfinite(out)))
    print("KERNEL_OK")
</pallas_src>

<mosaic_0001>
module attributes {stable_mosaic.version = 11 : i64} {
  func.func @conv1_pool_kernel(%arg0: memref<8x54x81xf32, #tpu.memory_space<vmem>>, %arg1: memref<16x54xf32, #tpu.memory_space<vmem>>, %arg2: memref<3x16x1xf32, #tpu.memory_space<vmem>>, %arg3: memref<2x16x81xf32, #tpu.memory_space<vmem>>) attributes {dimension_semantics = [], scalar_prefetch = 0 : i64, scratch_operands = 0 : i64, tpu.core_type = #tpu.core_type<tc>} {
    %c0 = arith.constant 0 : index
    %c0_0 = arith.constant 0 : index
    %0 = vector.load %arg1[%c0, %c0_0] : memref<16x54xf32, #tpu.memory_space<vmem>>, vector<16x54xf32>
    %c0_1 = arith.constant 0 : index
    %c0_2 = arith.constant 0 : index
    %c0_3 = arith.constant 0 : index
    %1 = vector.load %arg2[%c0_1, %c0_2, %c0_3] : memref<3x16x1xf32, #tpu.memory_space<vmem>>, vector<1x16x1xf32>
    %2 = vector.shape_cast %1 : vector<1x16x1xf32> to vector<16x1xf32>
    %c1 = arith.constant 1 : index
    %c0_4 = arith.constant 0 : index
    %c0_5 = arith.constant 0 : index
    %3 = vector.load %arg2[%c1, %c0_4, %c0_5] : memref<3x16x1xf32, #tpu.memory_space<vmem>>, vector<1x16x1xf32>
    %4 = vector.shape_cast %3 : vector<1x16x1xf32> to vector<16x1xf32>
    %c2 = arith.constant 2 : index
    %c0_6 = arith.constant 0 : index
    %c0_7 = arith.constant 0 : index
    %5 = vector.load %arg2[%c2, %c0_6, %c0_7] : memref<3x16x1xf32, #tpu.memory_space<vmem>>, vector<1x16x1xf32>
    %6 = vector.shape_cast %5 : vector<1x16x1xf32> to vector<16x1xf32>
    %cst = arith.constant 0.000000e+00 : f32
    %7 = vector.broadcast %cst : f32 to vector<16x1xf32>
    %c0_8 = arith.constant 0 : index
    %c0_9 = arith.constant 0 : index
    %c0_10 = arith.constant 0 : index
    %8 = vector.load %arg0[%c0_8, %c0_9, %c0_10] : memref<8x54x81xf32, #tpu.memory_space<vmem>>, vector<1x54x81xf32>
    %9 = vector.shape_cast %8 : vector<1x54x81xf32> to vector<54x81xf32>
    %cst_11 = arith.constant dense<0.000000e+00> : vector<16x81xf32>
    %10 = tpu.matmul %0, %9, %cst_11 {dimension_numbers = #tpu.dot_dimension_numbers<[1], [0], [0], [1], [0, 0, 1, 1], [], []>} : vector<16x54xf32>, vector<54x81xf32>, vector<16x81xf32> -> vector<16x81xf32>
    %11 = vector.broadcast %2 : vector<16x1xf32> to vector<16x81xf32>
    %12 = arith.addf %10, %11 : vector<16x81xf32>
    %cst_12 = arith.constant dense<0.000000e+00> : vector<16xf32>
    %13 = vector.multi_reduction <add>, %12, %cst_12 [1] : vector<16x81xf32> to vector<16xf32>
    %14 = vector.shape_cast %13 : vector<16xf32> to vector<16x1xf32>
    %15 = arith.addf %7, %14 : vector<16x1xf32>
    %c1_13 = arith.constant 1 : index
    %c0_14 = arith.constant 0 : index
    %c0_15 = arith.constant 0 : index
    %16 = vector.load %arg0[%c1_13, %c0_14, %c0_15] : memref<8x54x81xf32, #tpu.memory_space<vmem>>, vector<1x54x81xf32>
    %17 = vector.shape_cast %16 : vector<1x54x81xf32> to vector<54x81xf32>
    %cst_16 = arith.constant dense<0.000000e+00> : vector<16x81xf32>
    %18 = tpu.matmul %0, %17, %cst_16 {dimension_numbers = #tpu.dot_dimension_numbers<[1], [0], [0], [1], [0, 0, 1, 1], [], []>} : vector<16x54xf32>, vector<54x81xf32>, vector<16x81xf32> -> vector<16x81xf32>
    %19 = vector.broadcast %2 : vector<16x1xf32> to vector<16x81xf32>
    %20 = arith.addf %18, %19 : vector<16x81xf32>
    %cst_17 = arith.constant dense<0.000000e+00> : vector<16xf32>
    %21 = vector.multi_reduction <add>, %20, %cst_17 [1] : vector<16x81xf32> to vector<16xf32>
    %22 = vector.shape_cast %21 : vector<16xf32> to vector<16x1xf32>
    %23 = arith.addf %15, %22 : vector<16x1xf32>
    %c2_18 = arith.constant 2 : index
    %c0_19 = arith.constant 0 : index
    %c0_20 = arith.constant 0 : index
    %24 = vector.load %arg0[%c2_18, %c0_19, %c0_20] : memref<8x54x81xf32, #tpu.memory_space<vmem>>, vector<1x54x81xf32>
    %25 = vector.shape_cast %24 : vector<1x54x81xf32> to vector<54x81xf32>
    %cst_21 = arith.constant dense<0.000000e+00> : vector<16x81xf32>
    %26 = tpu.matmul %0, %25, %cst_21 {dimension_numbers = #tpu.dot_dimension_numbers<[1], [0], [0], [1], [0, 0, 1, 1], [], []>} : vector<16x54xf32>, vector<54x81xf32>, vector<16x81xf32> -> vector<16x81xf32>
    %27 = vector.broadcast %2 : vector<16x1xf32> to vector<16x81xf32>
    %28 = arith.addf %26, %27 : vector<16x81xf32>
    %cst_22 = arith.constant dense<0.000000e+00> : vector<16xf32>
    %29 = vector.multi_reduction <add>, %28, %cst_22 [1] : vector<16x81xf32> to vector<16xf32>
    %30 = vector.shape_cast %29 : vector<16xf32> to vector<16x1xf32>
    %31 = arith.addf %23, %30 : vector<16x1xf32>
    %c3 = arith.constant 3 : index
    %c0_23 = arith.constant 0 : index
    %c0_24 = arith.constant 0 : index
    %32 = vector.load %arg0[%c3, %c0_23, %c0_24] : memref<8x54x81xf32, #tpu.memory_space<vmem>>, vector<1x54x81xf32>
    %33 = vector.shape_cast %32 : vector<1x54x81xf32> to vector<54x81xf32>
    %cst_25 = arith.constant dense<0.000000e+00> : vector<16x81xf32>
    %34 = tpu.matmul %0, %33, %cst_25 {dimension_numbers = #tpu.dot_dimension_numbers<[1], [0], [0], [1], [0, 0, 1, 1], [], []>} : vector<16x54xf32>, vector<54x81xf32>, vector<16x81xf32> -> vector<16x81xf32>
    %35 = vector.broadcast %2 : vector<16x1xf32> to vector<16x81xf32>
    %36 = arith.addf %34, %35 : vector<16x81xf32>
    %cst_26 = arith.constant dense<0.000000e+00> : vector<16xf32>
    %37 = vector.multi_reduction <add>, %36, %cst_26 [1] : vector<16x81xf32> to vector<16xf32>
    %38 = vector.shape_cast %37 : vector<16xf32> to vector<16x1xf32>
    %39 = arith.addf %31, %38 : vector<16x1xf32>
    %c4 = arith.constant 4 : index
    %c0_27 = arith.constant 0 : index
    %c0_28 = arith.constant 0 : index
    %40 = vector.load %arg0[%c4, %c0_27, %c0_28] : memref<8x54x81xf32, #tpu.memory_space<vmem>>, vector<1x54x81xf32>
    %41 = vector.shape_cast %40 : vector<1x54x81xf32> to vector<54x81xf32>
    %cst_29 = arith.constant dense<0.000000e+00> : vector<16x81xf32>
    %42 = tpu.matmul %0, %41, %cst_29 {dimension_numbers = #tpu.dot_dimension_numbers<[1], [0], [0], [1], [0, 0, 1, 1], [], []>} : vector<16x54xf32>, vector<54x81xf32>, vector<16x81xf32> -> vector<16x81xf32>
    %43 = vector.broadcast %2 : vector<16x1xf32> to vector<16x81xf32>
    %44 = arith.addf %42, %43 : vector<16x81xf32>
    %cst_30 = arith.constant dense<0.000000e+00> : vector<16xf32>
    %45 = vector.multi_reduction <add>, %44, %cst_30 [1] : vector<16x81xf32> to vector<16xf32>
    %46 = vector.shape_cast %45 : vector<16xf32> to vector<16x1xf32>
    %47 = arith.addf %39, %46 : vector<16x1xf32>
    %c5 = arith.constant 5 : index
    %c0_31 = arith.constant 0 : index
    %c0_32 = arith.constant 0 : index
    %48 = vector.load %arg0[%c5, %c0_31, %c0_32] : memref<8x54x81xf32, #tpu.memory_space<vmem>>, vector<1x54x81xf32>
    %49 = vector.shape_cast %48 : vector<1x54x81xf32> to vector<54x81xf32>
    %cst_33 = arith.constant dense<0.000000e+00> : vector<16x81xf32>
    %50 = tpu.matmul %0, %49, %cst_33 {dimension_numbers = #tpu.dot_dimension_numbers<[1], [0], [0], [1], [0, 0, 1, 1], [], []>} : vector<16x54xf32>, vector<54x81xf32>, vector<16x81xf32> -> vector<16x81xf32>
    %51 = vector.broadcast %2 : vector<16x1xf32> to vector<16x81xf32>
    %52 = arith.addf %50, %51 : vector<16x81xf32>
    %cst_34 = arith.constant dense<0.000000e+00> : vector<16xf32>
    %53 = vector.multi_reduction <add>, %52, %cst_34 [1] : vector<16x81xf32> to vector<16xf32>
    %54 = vector.shape_cast %53 : vector<16xf32> to vector<16x1xf32>
    %55 = arith.addf %47, %54 : vector<16x1xf32>
    %c6 = arith.constant 6 : index
    %c0_35 = arith.constant 0 : index
    %c0_36 = arith.constant 0 : index
    %56 = vector.load %arg0[%c6, %c0_35, %c0_36] : memref<8x54x81xf32, #tpu.memory_space<vmem>>, vector<1x54x81xf32>
    %57 = vector.shape_cast %56 : vector<1x54x81xf32> to vector<54x81xf32>
    %cst_37 = arith.constant dense<0.000000e+00> : vector<16x81xf32>
    %58 = tpu.matmul %0, %57, %cst_37 {dimension_numbers = #tpu.dot_dimension_numbers<[1], [0], [0], [1], [0, 0, 1, 1], [], []>} : vector<16x54xf32>, vector<54x81xf32>, vector<16x81xf32> -> vector<16x81xf32>
    %59 = vector.broadcast %2 : vector<16x1xf32> to vector<16x81xf32>
    %60 = arith.addf %58, %59 : vector<16x81xf32>
    %cst_38 = arith.constant dense<0.000000e+00> : vector<16xf32>
    %61 = vector.multi_reduction <add>, %60, %cst_38 [1] : vector<16x81xf32> to vector<16xf32>
    %62 = vector.shape_cast %61 : vector<16xf32> to vector<16x1xf32>
    %63 = arith.addf %55, %62 : vector<16x1xf32>
    %c7 = arith.constant 7 : index
    %c0_39 = arith.constant 0 : index
    %c0_40 = arith.constant 0 : index
    %64 = vector.load %arg0[%c7, %c0_39, %c0_40] : memref<8x54x81xf32, #tpu.memory_space<vmem>>, vector<1x54x81xf32>
    %65 = vector.shape_cast %64 : vector<1x54x81xf32> to vector<54x81xf32>
    %cst_41 = arith.constant dense<0.000000e+00> : vector<16x81xf32>
    %66 = tpu.matmul %0, %65, %cst_41 {dimension_numbers = #tpu.dot_dimension_numbers<[1], [0], [0], [1], [0, 0, 1, 1], [], []>} : vector<16x54xf32>, vector<54x81xf32>, vector<16x81xf32> -> vector<16x81xf32>
    %67 = vector.broadcast %2 : vector<16x1xf32> to vector<16x81xf32>
    %68 = arith.addf %66, %67 : vector<16x81xf32>
    %cst_42 = arith.constant dense<0.000000e+00> : vector<16xf32>
    %69 = vector.multi_reduction <add>, %68, %cst_42 [1] : vector<16x81xf32> to vector<16xf32>
    %70 = vector.shape_cast %69 : vector<16xf32> to vector<16x1xf32>
    %71 = arith.addf %63, %70 : vector<16x1xf32>
    %cst_43 = arith.constant 0.00154320989 : f32
    %72 = vector.broadcast %cst_43 : f32 to vector<16x1xf32>
    %73 = arith.mulf %71, %72 : vector<16x1xf32>
    %cst_44 = arith.constant 0.000000e+00 : f32
    %74 = vector.broadcast %cst_44 : f32 to vector<16x1xf32>
    %75 = vector.broadcast %73 : vector<16x1xf32> to vector<16x81xf32>
    %76 = arith.subf %12, %75 : vector<16x81xf32>
    %77 = arith.mulf %76, %76 : vector<16x81xf32>
    %cst_45 = arith.constant dense<0.000000e+00> : vector<16xf32>
    %78 = vector.multi_reduction <add>, %77, %cst_45 [1] : vector<16x81xf32> to vector<16xf32>
    %79 = vector.shape_cast %78 : vector<16xf32> to vector<16x1xf32>
    %80 = arith.addf %74, %79 : vector<16x1xf32>
    %81 = vector.broadcast %73 : vector<16x1xf32> to vector<16x81xf32>
    %82 = arith.subf %20, %81 : vector<16x81xf32>
    %83 = arith.mulf %82, %82 : vector<16x81xf32>
    %cst_46 = arith.constant dense<0.000000e+00> : vector<16xf32>
    %84 = vector.multi_reduction <add>, %83, %cst_46 [1] : vector<16x81xf32> to vector<16xf32>
    %85 = vector.shape_cast %84 : vector<16xf32> to vector<16x1xf32>
    %86 = arith.addf %80, %85 : vector<16x1xf32>
    %87 = vector.broadcast %73 : vector<16x1xf32> to vector<16x81xf32>
    %88 = arith.subf %28, %87 : vector<16x81xf32>
    %89 = arith.mulf %88, %88 : vector<16x81xf32>
    %cst_47 = arith.constant dense<0.000000e+00> : vector<16xf32>
    %90 = vector.multi_reduction <add>, %89, %cst_47 [1] : vector<16x81xf32> to vector<16xf32>
    %91 = vector.shape_cast %90 : vector<16xf32> to vector<16x1xf32>
    %92 = arith.addf %86, %91 : vector<16x1xf32>
    %93 = vector.broadcast %73 : vector<16x1xf32> to vector<16x81xf32>
    %94 = arith.subf %36, %93 : vector<16x81xf32>
    %95 = arith.mulf %94, %94 : vector<16x81xf32>
    %cst_48 = arith.constant dense<0.000000e+00> : vector<16xf32>
    %96 = vector.multi_reduction <add>, %95, %cst_48 [1] : vector<16x81xf32> to vector<16xf32>
    %97 = vector.shape_cast %96 : vector<16xf32> to vector<16x1xf32>
    %98 = arith.addf %92, %97 : vector<16x1xf32>
    %99 = vector.broadcast %73 : vector<16x1xf32> to vector<16x81xf32>
    %100 = arith.subf %44, %99 : vector<16x81xf32>
    %101 = arith.mulf %100, %100 : vector<16x81xf32>
    %cst_49 = arith.constant dense<0.000000e+00> : vector<16xf32>
    %102 = vector.multi_reduction <add>, %101, %cst_49 [1] : vector<16x81xf32> to vector<16xf32>
    %103 = vector.shape_cast %102 : vector<16xf32> to vector<16x1xf32>
    %104 = arith.addf %98, %103 : vector<16x1xf32>
    %105 = vector.broadcast %73 : vector<16x1xf32> to vector<16x81xf32>
    %106 = arith.subf %52, %105 : vector<16x81xf32>
    %107 = arith.mulf %106, %106 : vector<16x81xf32>
    %cst_50 = arith.constant dense<0.000000e+00> : vector<16xf32>
    %108 = vector.multi_reduction <add>, %107, %cst_50 [1] : vector<16x81xf32> to vector<16xf32>
    %109 = vector.shape_cast %108 : vector<16xf32> to vector<16x1xf32>
    %110 = arith.addf %104, %109 : vector<16x1xf32>
    %111 = vector.broadcast %73 : vector<16x1xf32> to vector<16x81xf32>
    %112 = arith.subf %60, %111 : vector<16x81xf32>
    %113 = arith.mulf %112, %112 : vector<16x81xf32>
    %cst_51 = arith.constant dense<0.000000e+00> : vector<16xf32>
    %114 = vector.multi_reduction <add>, %113, %cst_51 [1] : vector<16x81xf32> to vector<16xf32>
    %115 = vector.shape_cast %114 : vector<16xf32> to vector<16x1xf32>
    %116 = arith.addf %110, %115 : vector<16x1xf32>
    %117 = vector.broadcast %73 : vector<16x1xf32> to vector<16x81xf32>
    %118 = arith.subf %68, %117 : vector<16x81xf32>
    %119 = arith.mulf %118, %118 : vector<16x81xf32>
    %cst_52 = arith.constant dense<0.000000e+00> : vector<16xf32>
    %120 = vector.multi_reduction <add>, %119, %cst_52 [1] : vector<16x81xf32> to vector<16xf32>
    %121 = vector.shape_cast %120 : vector<16xf32> to vector<16x1xf32>
    %122 = arith.addf %116, %121 : vector<16x1xf32>
    %cst_53 = arith.constant 0.00154320989 : f32
    %123 = vector.broadcast %cst_53 : f32 to vector<16x1xf32>
    %124 = arith.mulf %122, %123 : vector<16x1xf32>
    %cst_54 = arith.constant 9.99999974E-6 : f32
    %125 = vector.broadcast %cst_54 : f32 to vector<16x1xf32>
    %126 = arith.addf %124, %125 : vector<16x1xf32>
    %127 = math.rsqrt %126 : vector<16x1xf32>
    %128 = arith.mulf %4, %127 : vector<16x1xf32>
    %129 = arith.mulf %73, %128 : vector<16x1xf32>
    %130 = arith.subf %6, %129 : vector<16x1xf32>
    %131 = vector.broadcast %128 : vector<16x1xf32> to vector<16x81xf32>
    %132 = arith.mulf %12, %131 : vector<16x81xf32>
    %133 = vector.broadcast %130 : vector<16x1xf32> to vector<16x81xf32>
    %134 = arith.addf %132, %133 : vector<16x81xf32>
    %cst_55 = arith.constant 0.000000e+00 : f32
    %135 = vector.broadcast %cst_55 : f32 to vector<16x81xf32>
    %136 = arith.maximumf %134, %135 : vector<16x81xf32>
    %137 = vector.broadcast %128 : vector<16x1xf32> to vector<16x81xf32>
    %138 = arith.mulf %28, %137 : vector<16x81xf32>
    %139 = vector.broadcast %130 : vector<16x1xf32> to vector<16x81xf32>
    %140 = arith.addf %138, %139 : vector<16x81xf32>
    %cst_56 = arith.constant 0.000000e+00 : f32
    %141 = vector.broadcast %cst_56 : f32 to vector<16x81xf32>
    %142 = arith.maximumf %140, %141 : vector<16x81xf32>
    %143 = vector.broadcast %128 : vector<16x1xf32> to vector<16x81xf32>
    %144 = arith.mulf %44, %143 : vector<16x81xf32>
    %145 = vector.broadcast %130 : vector<16x1xf32> to vector<16x81xf32>
    %146 = arith.addf %144, %145 : vector<16x81xf32>
    %cst_57 = arith.constant 0.000000e+00 : f32
    %147 = vector.broadcast %cst_57 : f32 to vector<16x81xf32>
    %148 = arith.maximumf %146, %147 : vector<16x81xf32>
    %149 = vector.broadcast %128 : vector<16x1xf32> to vector<16x81xf32>
    %150 = arith.mulf %60, %149 : vector<16x81xf32>
    %151 = vector.broadcast %130 : vector<16x1xf32> to vector<16x81xf32>
    %152 = arith.addf %150, %151 : vector<16x81xf32>
    %cst_58 = arith.constant 0.000000e+00 : f32
    %153 = vector.broadcast %cst_58 : f32 to vector<16x81xf32>
    %154 = arith.maximumf %152, %153 : vector<16x81xf32>
    %155 = arith.maximumf %136, %142 : vector<16x81xf32>
    %156 = arith.maximumf %148, %154 : vector<16x81xf32>
    %157 = arith.maximumf %155, %156 : vector<16x81xf32>
    %c0_59 = arith.constant 0 : index
    %c0_60 = arith.constant 0 : index
    %c0_61 = arith.constant 0 : index
    %158 = vector.load %arg3[%c0_59, %c0_60, %c0_61] : memref<2x16x81xf32, #tpu.memory_space<vmem>>, vector<1x16x81xf32>
    %159 = vector.shape_cast %158 : vector<1x16x81xf32> to vector<16x81xf32>
    %160 = vector.shape_cast %157 : vector<16x81xf32> to vector<1x16x81xf32>
    tpu.vector_store %arg3[%c0_59, %c0_60, %c0_61], %160 {strides = array<i32>} : memref<2x16x81xf32, #tpu.memory_space<vmem>>, vector<1x16x81xf32>,
    %161 = vector.broadcast %128 : vector<16x1xf32> to vector<16x81xf32>
    %162 = arith.mulf %20, %161 : vector<16x81xf32>
    %163 = vector.broadcast %130 : vector<16x1xf32> to vector<16x81xf32>
    %164 = arith.addf %162, %163 : vector<16x81xf32>
    %cst_62 = arith.constant 0.000000e+00 : f32
    %165 = vector.broadcast %cst_62 : f32 to vector<16x81xf32>
    %166 = arith.maximumf %164, %165 : vector<16x81xf32>
    %167 = vector.broadcast %128 : vector<16x1xf32> to vector<16x81xf32>
    %168 = arith.mulf %36, %167 : vector<16x81xf32>
    %169 = vector.broadcast %130 : vector<16x1xf32> to vector<16x81xf32>
    %170 = arith.addf %168, %169 : vector<16x81xf32>
    %cst_63 = arith.constant 0.000000e+00 : f32
    %171 = vector.broadcast %cst_63 : f32 to vector<16x81xf32>
    %172 = arith.maximumf %170, %171 : vector<16x81xf32>
    %173 = vector.broadcast %128 : vector<16x1xf32> to vector<16x81xf32>
    %174 = arith.mulf %52, %173 : vector<16x81xf32>
    %175 = vector.broadcast %130 : vector<16x1xf32> to vector<16x81xf32>
    %176 = arith.addf %174, %175 : vector<16x81xf32>
    %cst_64 = arith.constant 0.000000e+00 : f32
    %177 = vector.broadcast %cst_64 : f32 to vector<16x81xf32>
    %178 = arith.maximumf %176, %177 : vector<16x81xf32>
    %179 = vector.broadcast %128 : vector<16x1xf32> to vector<16x81xf32>
    %180 = arith.mulf %68, %179 : vector<16x81xf32>
    %181 = vector.broadcast %130 : vector<16x1xf32> to vector<16x81xf32>
    %182 = arith.addf %180, %181 : vector<16x81xf32>
    %cst_65 = arith.constant 0.000000e+00 : f32
    %183 = vector.broadcast %cst_65 : f32 to vector<16x81xf32>
    %184 = arith.maximumf %182, %183 : vector<16x81xf32>
    %185 = arith.maximumf %166, %172 : vector<16x81xf32>
    %186 = arith.maximumf %178, %184 : vector<16x81xf32>
    %187 = arith.maximumf %185, %186 : vector<16x81xf32>
    %c1_66 = arith.constant 1 : index
    %c0_67 = arith.constant 0 : index
    %c0_68 = arith.constant 0 : index
    %188 = vector.load %arg3[%c1_66, %c0_67, %c0_68] : memref<2x16x81xf32, #tpu.memory_space<vmem>>, vector<1x16x81xf32>
    %189 = vector.shape_cast %188 : vector<1x16x81xf32> to vector<16x81xf32>
    %190 = vector.shape_cast %187 : vector<16x81xf32> to vector<1x16x81xf32>
    tpu.vector_store %arg3[%c1_66, %c0_67, %c0_68], %190 {strides = array<i32>} : memref<2x16x81xf32, #tpu.memory_space<vmem>>, vector<1x16x81xf32>,
    return
  }
}

module attributes {stable_mosaic.version = 11 : i64} {
  func.func @conv2_proj_kernel(%arg0: memref<2x144x16xf32, #tpu.memory_space<vmem>>, %arg1: memref<32x144xf32, #tpu.memory_space<vmem>>, %arg2: memref<3x32x1xf32, #tpu.memory_space<vmem>>, %arg3: memref<48x32xf32, #tpu.memory_space<vmem>>, %arg4: memref<48x1xf32, #tpu.memory_space<vmem>>, %arg5: memref<2x32x16xf32, #tpu.memory_space<vmem>>, %arg6: memref<2x8x16xf32, #tpu.memory_space<vmem>>, %arg7: memref<2x8x16xf32, #tpu.memory_space<vmem>>) attributes {dimension_semantics = [], scalar_prefetch = 0 : i64, scratch_operands = 0 : i64, tpu.core_type = #tpu.core_type<tc>} {
    %c0 = arith.constant 0 : index
    %c0_0 = arith.constant 0 : index
    %0 = vector.load %arg1[%c0, %c0_0] : memref<32x144xf32, #tpu.memory_space<vmem>>, vector<32x144xf32>
    %c0_1 = arith.constant 0 : index
    %c0_2 = arith.constant 0 : index
    %c0_3 = arith.constant 0 : index
    %1 = vector.load %arg2[%c0_1, %c0_2, %c0_3] : memref<3x32x1xf32, #tpu.memory_space<vmem>>, vector<1x32x1xf32>
    %2 = vector.shape_cast %1 : vector<1x32x1xf32> to vector<32x1xf32>
    %c1 = arith.constant 1 : index
    %c0_4 = arith.constant 0 : index
    %c0_5 = arith.constant 0 : index
    %3 = vector.load %arg2[%c1, %c0_4, %c0_5] : memref<3x32x1xf32, #tpu.memory_space<vmem>>, vector<1x32x1xf32>
    %4 = vector.shape_cast %3 : vector<1x32x1xf32> to vector<32x1xf32>
    %c2 = arith.constant 2 : index
    %c0_6 = arith.constant 0 : index
    %c0_7 = arith.constant 0 : index
    %5 = vector.load %arg2[%c2, %c0_6, %c0_7] : memref<3x32x1xf32, #tpu.memory_space<vmem>>, vector<1x32x1xf32>
    %6 = vector.shape_cast %5 : vector<1x32x1xf32> to vector<32x1xf32>
    %c0_8 = arith.constant 0 : index
    %c0_9 = arith.constant 0 : index
    %7 = vector.load %arg3[%c0_8, %c0_9] : memref<48x32xf32, #tpu.memory_space<vmem>>, vector<48x32xf32>
    %c0_10 = arith.constant 0 : index
    %c0_11 = arith.constant 0 : index
    %8 = vector.load %arg4[%c0_10, %c0_11] : memref<48x1xf32, #tpu.memory_space<vmem>>, vector<48x1xf32>
    %cst = arith.constant 0.000000e+00 : f32
    %9 = vector.broadcast %cst : f32 to vector<32x1xf32>
    %c0_12 = arith.constant 0 : index
    %c0_13 = arith.constant 0 : index
    %c0_14 = arith.constant 0 : index
    %10 = vector.load %arg0[%c0_12, %c0_13, %c0_14] : memref<2x144x16xf32, #tpu.memory_space<vmem>>, vector<1x144x16xf32>
    %11 = vector.shape_cast %10 : vector<1x144x16xf32> to vector<144x16xf32>
    %cst_15 = arith.constant dense<0.000000e+00> : vector<32x16xf32>
    %12 = tpu.matmul %0, %11, %cst_15 {dimension_numbers = #tpu.dot_dimension_numbers<[1], [0], [0], [1], [0, 0, 1, 1], [], []>} : vector<32x144xf32>, vector<144x16xf32>, vector<32x16xf32> -> vector<32x16xf32>
    %13 = vector.broadcast %2 : vector<32x1xf32> to vector<32x16xf32>
    %14 = arith.addf %12, %13 : vector<32x16xf32>
    %cst_16 = arith.constant dense<0.000000e+00> : vector<32xf32>
    %15 = vector.multi_reduction <add>, %14, %cst_16 [1] : vector<32x16xf32> to vector<32xf32>
    %16 = vector.shape_cast %15 : vector<32xf32> to vector<32x1xf32>
    %17 = arith.addf %9, %16 : vector<32x1xf32>
    %c1_17 = arith.constant 1 : index
    %c0_18 = arith.constant 0 : index
    %c0_19 = arith.constant 0 : index
    %18 = vector.load %arg0[%c1_17, %c0_18, %c0_19] : memref<2x144x16xf32, #tpu.memory_space<vmem>>, vector<1x144x16xf32>
    %19 = vector.shape_cast %18 : vector<1x144x16xf32> to vector<144x16xf32>
    %cst_20 = arith.constant dense<0.000000e+00> : vector<32x16xf32>
    %20 = tpu.matmul %0, %19, %cst_20 {dimension_numbers = #tpu.dot_dimension_numbers<[1], [0], [0], [1], [0, 0, 1, 1], [], []>} : vector<32x144xf32>, vector<144x16xf32>, vector<32x16xf32> -> vector<32x16xf32>
    %21 = vector.broadcast %2 : vector<32x1xf32> to vector<32x16xf32>
    %22 = arith.addf %20, %21 : vector<32x16xf32>
    %cst_21 = arith.constant dense<0.000000e+00> : vector<32xf32>
    %23 = vector.multi_reduction <add>, %22, %cst_21 [1] : vector<32x16xf32> to vector<32xf32>
    %24 = vector.shape_cast %23 : vector<32xf32> to vector<32x1xf32>
    %25 = arith.addf %17, %24 : vector<32x1xf32>
    %cst_22 = arith.constant 3.125000e-02 : f32
    %26 = vector.broadcast %cst_22 : f32 to vector<32x1xf32>
    %27 = arith.mulf %25, %26 : vector<32x1xf32>
    %cst_23 = arith.constant 0.000000e+00 : f32
    %28 = vector.broadcast %cst_23 : f32 to vector<32x1xf32>
    %29 = vector.broadcast %27 : vector<32x1xf32> to vector<32x16xf32>
    %30 = arith.subf %14, %29 : vector<32x16xf32>
    %31 = arith.mulf %30, %30 : vector<32x16xf32>
    %cst_24 = arith.constant dense<0.000000e+00> : vector<32xf32>
    %32 = vector.multi_reduction <add>, %31, %cst_24 [1] : vector<32x16xf32> to vector<32xf32>
    %33 = vector.shape_cast %32 : vector<32xf32> to vector<32x1xf32>
    %34 = arith.addf %28, %33 : vector<32x1xf32>
    %35 = vector.broadcast %27 : vector<32x1xf32> to vector<32x16xf32>
    %36 = arith.subf %22, %35 : vector<32x16xf32>
    %37 = arith.mulf %36, %36 : vector<32x16xf32>
    %cst_25 = arith.constant dense<0.000000e+00> : vector<32xf32>
    %38 = vector.multi_reduction <add>, %37, %cst_25 [1] : vector<32x16xf32> to vector<32xf32>
    %39 = vector.shape_cast %38 : vector<32xf32> to vector<32x1xf32>
    %40 = arith.addf %34, %39 : vector<32x1xf32>
    %cst_26 = arith.constant 3.125000e-02 : f32
    %41 = vector.broadcast %cst_26 : f32 to vector<32x1xf32>
    %42 = arith.mulf %40, %41 : vector<32x1xf32>
    %cst_27 = arith.constant 9.99999974E-6 : f32
    %43 = vector.broadcast %cst_27 : f32 to vector<32x1xf32>
    %44 = arith.addf %42, %43 : vector<32x1xf32>
    %45 = math.rsqrt %44 : vector<32x1xf32>
    %46 = arith.mulf %4, %45 : vector<32x1xf32>
    %47 = arith.mulf %27, %46 : vector<32x1xf32>
    %48 = arith.subf %6, %47 : vector<32x1xf32>
    %49 = vector.broadcast %46 : vector<32x1xf32> to vector<32x16xf32>
    %50 = arith.mulf %14, %49 : vector<32x16xf32>
    %51 = vector.broadcast %48 : vector<32x1xf32> to vector<32x16xf32>
    %52 = arith.addf %50, %51 : vector<32x16xf32>
    %cst_28 = arith.constant 0.000000e+00 : f32
    %53 = vector.broadcast %cst_28 : f32 to vector<32x16xf32>
    %54 = arith.maximumf %52, %53 : vector<32x16xf32>
    %cst_29 = arith.constant dense<0.000000e+00> : vector<48x16xf32>
    %55 = tpu.matmul %7, %54, %cst_29 {dimension_numbers = #tpu.dot_dimension_numbers<[1], [0], [0], [1], [0, 0, 1, 1], [], []>} : vector<48x32xf32>, vector<32x16xf32>, vector<48x16xf32> -> vector<48x16xf32>
    %56 = vector.broadcast %8 : vector<48x1xf32> to vector<48x16xf32>
    %57 = arith.addf %55, %56 : vector<48x16xf32>
    %58 = vector.extract_strided_slice %57 {offsets = [0, 0], sizes = [32, 16], strides = [1, 1]} : vector<48x16xf32> to vector<32x16xf32>
    %c0_30 = arith.constant 0 : index
    %c0_31 = arith.constant 0 : index
    %c0_32 = arith.constant 0 : index
    %59 = vector.load %arg5[%c0_30, %c0_31, %c0_32] : memref<2x32x16xf32, #tpu.memory_space<vmem>>, vector<1x32x16xf32>
    %60 = vector.shape_cast %59 : vector<1x32x16xf32> to vector<32x16xf32>
    %61 = vector.shape_cast %58 : vector<32x16xf32> to vector<1x32x16xf32>
    tpu.vector_store %arg5[%c0_30, %c0_31, %c0_32], %61 {strides = array<i32>} : memref<2x32x16xf32, #tpu.memory_space<vmem>>, vector<1x32x16xf32>,
    %62 = vector.extract_strided_slice %57 {offsets = [32, 0], sizes = [8, 16], strides = [1, 1]} : vector<48x16xf32> to vector<8x16xf32>
    %c0_33 = arith.constant 0 : index
    %c0_34 = arith.constant 0 : index
    %c0_35 = arith.constant 0 : index
    %63 = vector.load %arg6[%c0_33, %c0_34, %c0_35] : memref<2x8x16xf32, #tpu.memory_space<vmem>>, vector<1x8x16xf32>
    %64 = vector.shape_cast %63 : vector<1x8x16xf32> to vector<8x16xf32>
    %65 = vector.shape_cast %62 : vector<8x16xf32> to vector<1x8x16xf32>
    tpu.vector_store %arg6[%c0_33, %c0_34, %c0_35], %65 {strides = array<i32>} : memref<2x8x16xf32, #tpu.memory_space<vmem>>, vector<1x8x16xf32>,
    %66 = vector.extract_strided_slice %57 {offsets = [40, 0], sizes = [8, 16], strides = [1, 1]} : vector<48x16xf32> to vector<8x16xf32>
    %c0_36 = arith.constant 0 : index
    %c0_37 = arith.constant 0 : index
    %c0_38 = arith.constant 0 : index
    %67 = vector.load %arg7[%c0_36, %c0_37, %c0_38] : memref<2x8x16xf32, #tpu.memory_space<vmem>>, vector<1x8x16xf32>
    %68 = vector.shape_cast %67 : vector<1x8x16xf32> to vector<8x16xf32>
    %69 = vector.shape_cast %66 : vector<8x16xf32> to vector<1x8x16xf32>
    tpu.vector_store %arg7[%c0_36, %c0_37, %c0_38], %69 {strides = array<i32>} : memref<2x8x16xf32, #tpu.memory_space<vmem>>, vector<1x8x16xf32>,
    %70 = vector.broadcast %46 : vector<32x1xf32> to vector<32x16xf32>
    %71 = arith.mulf %22, %70 : vector<32x16xf32>
    %72 = vector.broadcast %48 : vector<32x1xf32> to vector<32x16xf32>
    %73 = arith.addf %71, %72 : vector<32x16xf32>
    %cst_39 = arith.constant 0.000000e+00 : f32
    %74 = vector.broadcast %cst_39 : f32 to vector<32x16xf32>
    %75 = arith.maximumf %73, %74 : vector<32x16xf32>
    %cst_40 = arith.constant dense<0.000000e+00> : vector<48x16xf32>
    %76 = tpu.matmul %7, %75, %cst_40 {dimension_numbers = #tpu.dot_dimension_numbers<[1], [0], [0], [1], [0, 0, 1, 1], [], []>} : vector<48x32xf32>, vector<32x16xf32>, vector<48x16xf32> -> vector<48x16xf32>
    %77 = vector.broadcast %8 : vector<48x1xf32> to vector<48x16xf32>
    %78 = arith.addf %76, %77 : vector<48x16xf32>
    %79 = vector.extract_strided_slice %78 {offsets = [0, 0], sizes = [32, 16], strides = [1, 1]} : vector<48x16xf32> to vector<32x16xf32>
    %c1_41 = arith.constant 1 : index
    %c0_42 = arith.constant 0 : index
    %c0_43 = arith.constant 0 : index
    %80 = vector.load %arg5[%c1_41, %c0_42, %c0_43] : memref<2x32x16xf32, #tpu.memory_space<vmem>>, vector<1x32x16xf32>
    %81 = vector.shape_cast %80 : vector<1x32x16xf32> to vector<32x16xf32>
    %82 = vector.shape_cast %79 : vector<32x16xf32> to vector<1x32x16xf32>
    tpu.vector_store %arg5[%c1_41, %c0_42, %c0_43], %82 {strides = array<i32>} : memref<2x32x16xf32, #tpu.memory_space<vmem>>, vector<1x32x16xf32>,
    %83 = vector.extract_strided_slice %78 {offsets = [32, 0], sizes = [8, 16], strides = [1, 1]} : vector<48x16xf32> to vector<8x16xf32>
    %c1_44 = arith.constant 1 : index
    %c0_45 = arith.constant 0 : index
    %c0_46 = arith.constant 0 : index
    %84 = vector.load %arg6[%c1_44, %c0_45, %c0_46] : memref<2x8x16xf32, #tpu.memory_space<vmem>>, vector<1x8x16xf32>
    %85 = vector.shape_cast %84 : vector<1x8x16xf32> to vector<8x16xf32>
    %86 = vector.shape_cast %83 : vector<8x16xf32> to vector<1x8x16xf32>
    tpu.vector_store %arg6[%c1_44, %c0_45, %c0_46], %86 {strides = array<i32>} : memref<2x8x16xf32, #tpu.memory_space<vmem>>, vector<1x8x16xf32>,
    %87 = vector.extract_strided_slice %78 {offsets = [40, 0], sizes = [8, 16], strides = [1, 1]} : vector<48x16xf32> to vector<8x16xf32>
    %c1_47 = arith.constant 1 : index
    %c0_48 = arith.constant 0 : index
    %c0_49 = arith.constant 0 : index
    %88 = vector.load %arg7[%c1_47, %c0_48, %c0_49] : memref<2x8x16xf32, #tpu.memory_space<vmem>>, vector<1x8x16xf32>
    %89 = vector.shape_cast %88 : vector<1x8x16xf32> to vector<8x16xf32>
    %90 = vector.shape_cast %87 : vector<8x16xf32> to vector<1x8x16xf32>
    tpu.vector_store %arg7[%c1_47, %c0_48, %c0_49], %90 {strides = array<i32>} : memref<2x8x16xf32, #tpu.memory_space<vmem>>, vector<1x8x16xf32>,
    return
  }
}

module attributes {stable_mosaic.version = 11 : i64} {
  func.func @attention_kernel(%arg0: memref<32x8xf32, #tpu.memory_space<vmem>>, %arg1: memref<32x8xf32, #tpu.memory_space<vmem>>, %arg2: memref<64x16xf32, #tpu.memory_space<vmem>>, %arg3: memref<2x64x32xf32, #tpu.memory_space<vmem>>) attributes {dimension_semantics = [], scalar_prefetch = 0 : i64, scratch_operands = 0 : i64, tpu.core_type = #tpu.core_type<tc>} {
    %c0 = arith.constant 0 : index
    %c0_0 = arith.constant 0 : index
    %0 = vector.load %arg0[%c0, %c0_0] : memref<32x8xf32, #tpu.memory_space<vmem>>, vector<32x8xf32>
    %c0_1 = arith.constant 0 : index
    %c0_2 = arith.constant 0 : index
    %1 = vector.load %arg1[%c0_1, %c0_2] : memref<32x8xf32, #tpu.memory_space<vmem>>, vector<32x8xf32>
    %2 = tpu.transpose %1, [1, 0] : vector<32x8xf32> -> vector<8x32xf32>
    %cst = arith.constant dense<0.000000e+00> : vector<32x32xf32>
    %3 = tpu.matmul %0, %2, %cst {dimension_numbers = #tpu.dot_dimension_numbers<[1], [0], [0], [1], [0, 0, 1, 1], [], []>} : vector<32x8xf32>, vector<8x32xf32>, vector<32x32xf32> -> vector<32x32xf32>
    %cst_3 = arith.constant dense<0xFF800000> : vector<32xf32>
    %4 = vector.multi_reduction <maximumf>, %3, %cst_3 [1] : vector<32x32xf32> to vector<32xf32>
    %5 = vector.shape_cast %4 : vector<32xf32> to vector<32x1xf32>
    %6 = vector.broadcast %5 : vector<32x1xf32> to vector<32x32xf32>
    %7 = arith.subf %3, %6 : vector<32x32xf32>
    %8 = math.exp %7 : vector<32x32xf32>
    %cst_4 = arith.constant dense<0.000000e+00> : vector<32xf32>
    %9 = vector.multi_reduction <add>, %8, %cst_4 [1] : vector<32x32xf32> to vector<32xf32>
    %10 = vector.shape_cast %9 : vector<32xf32> to vector<32x1xf32>
    %11 = tpu.reciprocal %10 {approx = true} : vector<32x1xf32> -> vector<32x1xf32>
    %12 = vector.broadcast %11 : vector<32x1xf32> to vector<32x32xf32>
    %13 = arith.mulf %8, %12 : vector<32x32xf32>
    %c0_5 = arith.constant 0 : index
    %c0_6 = arith.constant 0 : index
    %14 = vector.load %arg2[%c0_5, %c0_6] : memref<64x16xf32, #tpu.memory_space<vmem>>, vector<64x16xf32>
    %15 = vector.extract_strided_slice %13 {offsets = [0, 0], sizes = [32, 16], strides = [1, 1]} : vector<32x32xf32> to vector<32x16xf32>
    %16 = tpu.transpose %15, [1, 0] : vector<32x16xf32> -> vector<16x32xf32>
    %cst_7 = arith.constant dense<0.000000e+00> : vector<64x32xf32>
    %17 = tpu.matmul %14, %16, %cst_7 {dimension_numbers = #tpu.dot_dimension_numbers<[1], [0], [0], [1], [0, 0, 1, 1], [], []>} : vector<64x16xf32>, vector<16x32xf32>, vector<64x32xf32> -> vector<64x32xf32>
    %c0_8 = arith.constant 0 : index
    %c0_9 = arith.constant 0 : index
    %c0_10 = arith.constant 0 : index
    %18 = vector.load %arg3[%c0_8, %c0_9, %c0_10] : memref<2x64x32xf32, #tpu.memory_space<vmem>>, vector<1x64x32xf32>
    %19 = vector.shape_cast %18 : vector<1x64x32xf32> to vector<64x32xf32>
    %20 = vector.shape_cast %17 : vector<64x32xf32> to vector<1x64x32xf32>
    tpu.vector_store %arg3[%c0_8, %c0_9, %c0_10], %20 {strides = array<i32>} : memref<2x64x32xf32, #tpu.memory_space<vmem>>, vector<1x64x32xf32>,
    %21 = vector.extract_strided_slice %13 {offsets = [0, 16], sizes = [32, 16], strides = [1, 1]} : vector<32x32xf32> to vector<32x16xf32>
    %22 = tpu.transpose %21, [1, 0] : vector<32x16xf32> -> vector<16x32xf32>
    %cst_11 = arith.constant dense<0.000000e+00> : vector<64x32xf32>
    %23 = tpu.matmul %14, %22, %cst_11 {dimension_numbers = #tpu.dot_dimension_numbers<[1], [0], [0], [1], [0, 0, 1, 1], [], []>} : vector<64x16xf32>, vector<16x32xf32>, vector<64x32xf32> -> vector<64x32xf32>
    %c1 = arith.constant 1 : index
    %c0_12 = arith.constant 0 : index
    %c0_13 = arith.constant 0 : index
    %24 = vector.load %arg3[%c1, %c0_12, %c0_13] : memref<2x64x32xf32, #tpu.memory_space<vmem>>, vector<1x64x32xf32>
    %25 = vector.shape_cast %24 : vector<1x64x32xf32> to vector<64x32xf32>
    %26 = vector.shape_cast %23 : vector<64x32xf32> to vector<1x64x32xf32>
    tpu.vector_store %arg3[%c1, %c0_12, %c0_13], %26 {strides = array<i32>} : memref<2x64x32xf32, #tpu.memory_space<vmem>>, vector<1x64x32xf32>,
    return
  }
}

</mosaic_0001>

<llo_original>
// kernel: _lambda_.3
$region0: #{_lambda_.3}
  #allocation0 [shape = 'u32[]', space=smem, size = 0x4, offset = 0x4, fixed_abs, tag = 'smem constant byte address 0x4 - core index']
  #allocation1 [shape = 'u32[144,128]{1,0:T(1,128)}', space=vmem, size = 0x12000, scoped, tag = 'internal scratch']
  %s0 = inlined_call_operand.vmem [shape: f32[8,54,81], index: 0, kind: input, shape index: {}]
  %s1 = inlined_call_operand.vmem [shape: f32[16,54], index: 1, kind: input, shape index: {}]
  %s2 = inlined_call_operand.vmem [shape: f32[3,16,1], index: 2, kind: input, shape index: {}]
  %s3 = inlined_call_operand.vmem [shape: f32[2,16,81], index: 3, kind: output, shape index: {}]
  %s4 = sld [smem:[#allocation0]]
  $region22: #{_lambda_.3} parent=0
    _
  %s6 = ssub.s32 1, %s4
  %s7 = scalar_select 0, %s6, %s4
  // Predicated region
  $region2: #{_lambda_.3} parent=0 // pred_check
    _
  $region3: #{_lambda_.3} parent=0 // pred_check_branch
    %9 = sbr.rel (0) target = $region5
  $region4: #{_lambda_.3} parent=0 // pred_region
    _
  $region5: #{_lambda_.3} parent=0 // pred_fallthru
    _
  // Predicated region
  $region6: #{_lambda_.3} parent=0 // pred_check
    _
  $region7: #{_lambda_.3} parent=0 // pred_check_branch
    %11 = sbr.rel (0) target = $region9
  $region8: #{_lambda_.3} parent=0 // pred_region
    _
  $region9: #{_lambda_.3} parent=0 // pred_fallthru
    _
  // Predicated region
  $region10: #{_lambda_.3} parent=0 // pred_check
    _
  $region11: #{_lambda_.3} parent=0 // pred_check_branch
    %13 = sbr.rel (0) target = $region13
  $region12: #{_lambda_.3} parent=0 // pred_region
    _
  $region13: #{_lambda_.3} parent=0 // pred_fallthru
    _
  %v14 = vld [vmem:[%s1] sm:$0xff]
  %v15 = vld [vmem:[%s1 + $0x8] sm:$0xff]
  %v16 = vld [vmem:[%s2] sm:$0xff]
  %v17 = vld [vmem:[%s2 + $0x8] sm:$0xff]
  %s18 = scalar_lea.vmem %s2, 16
  %v19 = vld [vmem:[%s18] sm:$0xff]
  %v20 = vld [vmem:[%s18 + $0x8] sm:$0xff]
  %s21 = scalar_lea.vmem %s2, 32
  %v22 = vld [vmem:[%s21] sm:$0xff]
  %v23 = vld [vmem:[%s21 + $0x8] sm:$0xff]
  %v24 = vld [vmem:[%s0] sm:$0xff]
  %v25 = vld [vmem:[%s0 + $0x8] sm:$0xff]
  %v26 = vld [vmem:[%s0 + $0x10] sm:$0xff]
  %v27 = vld [vmem:[%s0 + $0x18] sm:$0xff]
  %v28 = vld [vmem:[%s0 + $0x20] sm:$0xff]
  %v29 = vld [vmem:[%s0 + $0x28] sm:$0xff]
  %v30 = vld [vmem:[%s0 + $0x30] sm:$0x3f]
  %32 = vset.pattern.permute.xlu0 0
  %33 = vperm.xlu0 %32, %v16
  %v34 = vpop.permute.xlu0 %33
  %37 = vset.pattern.permute.xlu0 0
  %38 = vperm.xlu0 %37, %v17
  %v39 = vpop.permute.xlu0 %38
  %vm41 = vcmask 441344
  %v43 = vsel %vm41, %v14, 0
  %v46 = vsel %vm41, %v15, 0
  %vm48 = vcmask 1045504
  %v50 = vsel %vm48, %v30, 0
  %52 = vmatprep.subr.mxu0 0.0
  %53 = vmatpush1.msra.mxu0 0.0
  %54 = vmatprep.subr.mxu0 0.0
  %55 = vmatpush1.msra.mxu0 0.0
  %56 = vmatprep.subr.mxu0 0.0
  %57 = vmatpush1.msra.mxu0 0.0
  %58 = vmatprep.subr.mxu0 0.0
  %59 = vmatpush1.msra.mxu0 0.0
  %60 = vmatprep.subr.mxu0 0.0
  %61 = vmatpush1.msra.mxu0 0.0
  %62 = vmatprep.subr.mxu0 0.0
  %63 = vmatpush1.msra.mxu0 0.0
  %64 = vmatprep.subr.mxu0 0.0
  %65 = vmatpush1.msra.mxu0 0.0
  %66 = vmatprep.subr.mxu0 0.0
  %67 = vmatpush1.msra.mxu0 0.0
  %68 = vmatprep.subr.mxu0 0.0
  %69 = vmatpush1.msra.mxu0 0.0
  %70 = vmatprep.subr.mxu0 0.0
  %71 = vmatpush1.msra.mxu0 %v50
  %72 = vmatprep.subr.mxu0 0.0
  %73 = vmatpush1.msra.mxu0 %v29
  %74 = vmatprep.subr.mxu0 0.0
  %75 = vmatpush1.msra.mxu0 %v28
  %76 = vmatprep.subr.mxu0 0.0
  %77 = vmatpush1.msra.mxu0 %v27
  %78 = vmatprep.subr.mxu0 0.0
  %79 = vmatpush1.msra.mxu0 %v26
  %80 = vmatprep.subr.mxu0 0.0
  %81 = vmatpush1.msra.mxu0 %v25
  %82 = vmatprep.subr.mxu0 0.0
  %83 = vmatpush1.msra.mxu0 %v24
  %84 = vmatprep.subr.mxu0 0.0
  %85 = vmatpush2.msra.mxu0 0.0
  %86 = vmatprep.subr.mxu0 0.0
  %87 = vmatpush2.msra.mxu0 0.0
  %88 = vmatprep.subr.mxu0 0.0
  %89 = vmatpush2.msra.mxu0 0.0
  %90 = vmatprep.subr.mxu0 0.0
  %91 = vmatpush2.msra.mxu0 0.0
  %92 = vmatprep.subr.mxu0 0.0
  %93 = vmatpush2.msra.mxu0 0.0
  %94 = vmatprep.subr.mxu0 0.0
  %95 = vmatpush2.msra.mxu0 0.0
  %96 = vmatprep.subr.mxu0 0.0
  %97 = vmatpush2.msra.mxu0 0.0
  %98 = vmatprep.subr.mxu0 0.0
  %99 = vmatpush2.msra.mxu0 0.0
  %100 = vmatprep.subr.mxu0 0.0
  %101 = vmatpush2.msra.mxu0 0.0
  %102 = vmatprep.subr.mxu0 0.0
  %103 = vmatpush2.msra.mxu0 0.0
  %104 = vmatprep.subr.mxu0 0.0
  %105 = vmatpush2.msra.mxu0 0.0
  %106 = vmatprep.subr.mxu0 0.0
  %107 = vmatpush2.msra.mxu0 0.0
  %108 = vmatprep.subr.mxu0 0.0
  %109 = vmatpush2.msra.mxu0 0.0
  %110 = vmatprep.subr.mxu0 0.0
  %111 = vmatpush2.msra.mxu0 0.0
  %112 = vmatprep.subr.mxu0 0.0
  %113 = vmatpush2.msra.mxu0 0.0
  %114 = vmatprep.subr.mxu0 0.0
  %115 = vmatpush2.msra.mxu0 0.0
  %116 = vmatprep.mubr.f32.mxu0 0.0
  %117 = vmatmul.mubr.f32.gmra.mxu0 %v43
  %v118 = vpop.f32.mrf.mxu0
  %v119 = vadd.f32 %v34, %v118
  %v120 = vpop.f32.mrf.mxu0
  %121 = vmatprep.mubr.f32.mxu0 0.0
  %122 = vmatmul.mubr.f32.gmra.mxu0 %v46
  %v123 = vpop.f32.mrf.mxu0
  %v124 = vadd.f32 %v39, %v123
  %v125 = vpop.f32.mrf.mxu0
  %126 = vdwg.mxu0
  %vm127 = vcmask 662528
  %v128 = vsel %vm127, %v119, 0.0
  %129 = vadd.xlane.f32.xlu0 %v128
  %v130 = vpop.xlane.xlu0 %129
  %v131 = vsel %vm127, %v124, 0.0
  %132 = vadd.xlane.f32.xlu0 %v131
  %v133 = vpop.xlane.xlu0 %132
  %v134 = vadd.f32 %v130, 0.0
  %v135 = vadd.f32 %v133, 0.0
  %s136 = scalar_lea.vmem %s0, 56
  %v137 = vld [vmem:[%s136] sm:$0xff]
  %v138 = vld [vmem:[%s136 + $0x8] sm:$0xff]
  %v139 = vld [vmem:[%s136 + $0x10] sm:$0xff]
  %v140 = vld [vmem:[%s136 + $0x18] sm:$0xff]
  %v141 = vld [vmem:[%s136 + $0x20] sm:$0xff]
  %v142 = vld [vmem:[%s136 + $0x28] sm:$0xff]
  %v143 = vld [vmem:[%s136 + $0x30] sm:$0x3f]
  %v145 = vsel %vm48, %v143, 0
  %147 = vmatprep.subr.mxu0 0.0
  %148 = vmatpush1.msra.mxu0 0.0
  %149 = vmatprep.subr.mxu0 0.0
  %150 = vmatpush1.msra.mxu0 0.0
  %151 = vmatprep.subr.mxu0 0.0
  %152 = vmatpush1.msra.mxu0 0.0
  %153 = vmatprep.subr.mxu0 0.0
  %154 = vmatpush1.msra.mxu0 0.0
  %155 = vmatprep.subr.mxu0 0.0
  %156 = vmatpush1.msra.mxu0 0.0
  %157 = vmatprep.subr.mxu0 0.0
  %158 = vmatpush1.msra.mxu0 0.0
  %159 = vmatprep.subr.mxu0 0.0
  %160 = vmatpush1.msra.mxu0 0.0
  %161 = vmatprep.subr.mxu0 0.0
  %162 = vmatpush1.msra.mxu0 0.0
  %163 = vmatprep.subr.mxu0 0.0
  %164 = vmatpush1.msra.mxu0 0.0
  %165 = vmatprep.subr.mxu0 0.0
  %166 = vmatpush1.msra.mxu0 %v145
  %167 = vmatprep.subr.mxu0 0.0
  %168 = vmatpush1.msra.mxu0 %v142
  %169 = vmatprep.subr.mxu0 0.0
  %170 = vmatpush1.msra.mxu0 %v141
  %171 = vmatprep.subr.mxu0 0.0
  %172 = vmatpush1.msra.mxu0 %v140
  %173 = vmatprep.subr.mxu0 0.0
  %174 = vmatpush1.msra.mxu0 %v139
  %175 = vmatprep.subr.mxu0 0.0
  %176 = vmatpush1.msra.mxu0 %v138
  %177 = vmatprep.subr.mxu0 0.0
  %178 = vmatpush1.msra.mxu0 %v137
  %179 = vmatprep.subr.mxu0 0.0
  %180 = vmatpush2.msra.mxu0 0.0
  %181 = vmatprep.subr.mxu0 0.0
  %182 = vmatpush2.msra.mxu0 0.0
  %183 = vmatprep.subr.mxu0 0.0
  %184 = vmatpush2.msra.mxu0 0.0
  %185 = vmatprep.subr.mxu0 0.0
  %186 = vmatpush2.msra.mxu0 0.0
  %187 = vmatprep.subr.mxu0 0.0
  %188 = vmatpush2.msra.mxu0 0.0
  %189 = vmatprep.subr.mxu0 0.0
  %190 = vmatpush2.msra.mxu0 0.0
  %191 = vmatprep.subr.mxu0 0.0
  %192 = vmatpush2.msra.mxu0 0.0
  %193 = vmatprep.subr.mxu0 0.0
  %194 = vmatpush2.msra.mxu0 0.0
  %195 = vmatprep.subr.mxu0 0.0
  %196 = vmatpush2.msra.mxu0 0.0
  %197 = vmatprep.subr.mxu0 0.0
  %198 = vmatpush2.msra.mxu0 0.0
  %199 = vmatprep.subr.mxu0 0.0
  %200 = vmatpush2.msra.mxu0 0.0
  %201 = vmatprep.subr.mxu0 0.0
  %202 = vmatpush2.msra.mxu0 0.0
  %203 = vmatprep.subr.mxu0 0.0
  %204 = vmatpush2.msra.mxu0 0.0
  %205 = vmatprep.subr.mxu0 0.0
  %206 = vmatpush2.msra.mxu0 0.0
  %207 = vmatprep.subr.mxu0 0.0
  %208 = vmatpush2.msra.mxu0 0.0
  %209 = vmatprep.subr.mxu0 0.0
  %210 = vmatpush2.msra.mxu0 0.0
  %211 = vmatprep.mubr.f32.mxu0 0.0
  %212 = vmatmul.mubr.f32.gmra.mxu0 %v43
  %v213 = vpop.f32.mrf.mxu0
  %v214 = vadd.f32 %v34, %v213
  %v215 = vpop.f32.mrf.mxu0
  %216 = vmatprep.mubr.f32.mxu0 0.0
  %217 = vmatmul.mubr.f32.gmra.mxu0 %v46
  %v218 = vpop.f32.mrf.mxu0
  %v219 = vadd.f32 %v39, %v218
  %v220 = vpop.f32.mrf.mxu0
  %221 = vdwg.mxu0
  %v222 = vsel %vm127, %v214, 0.0
  %223 = vadd.xlane.f32.xlu0 %v222
  %v224 = vpop.xlane.xlu0 %223
  %v225 = vsel %vm127, %v219, 0.0
  %226 = vadd.xlane.f32.xlu0 %v225
  %v227 = vpop.xlane.xlu0 %226
  %v228 = vadd.f32 %v134, %v224
  %v229 = vadd.f32 %v135, %v227
  %s230 = scalar_lea.vmem %s0, 112
  %v231 = vld [vmem:[%s230] sm:$0xff]
  %v232 = vld [vmem:[%s230 + $0x8] sm:$0xff]
  %v233 = vld [vmem:[%s230 + $0x10] sm:$0xff]
  %v234 = vld [vmem:[%s230 + $0x18] sm:$0xff]
  %v235 = vld [vmem:[%s230 + $0x20] sm:$0xff]
  %v236 = vld [vmem:[%s230 + $0x28] sm:$0xff]
  %v237 = vld [vmem:[%s230 + $0x30] sm:$0x3f]
  %v239 = vsel %vm48, %v237, 0
  %241 = vmatprep.subr.mxu0 0.0
  %242 = vmatpush1.msra.mxu0 0.0
  %243 = vmatprep.subr.mxu0 0.0
  %244 = vmatpush1.msra.mxu0 0.0
  %245 = vmatprep.subr.mxu0 0.0
  %246 = vmatpush1.msra.mxu0 0.0
  %247 = vmatprep.subr.mxu0 0.0
  %248 = vmatpush1.msra.mxu0 0.0
  %249 = vmatprep.subr.mxu0 0.0
  %250 = vmatpush1.msra.mxu0 0.0
  %251 = vmatprep.subr.mxu0 0.0
  %252 = vmatpush1.msra.mxu0 0.0
  %253 = vmatprep.subr.mxu0 0.0
  %254 = vmatpush1.msra.mxu0 0.0
  %255 = vmatprep.subr.mxu0 0.0
  %256 = vmatpush1.msra.mxu0 0.0
  %257 = vmatprep.subr.mxu0 0.0
  %258 = vmatpush1.msra.mxu0 0.0
  %259 = vmatprep.subr.mxu0 0.0
  %260 = vmatpush1.msra.mxu0 %v239
  %261 = vmatprep.subr.mxu0 0.0
  %262 = vmatpush1.msra.mxu0 %v236
  %263 = vmatprep.subr.mxu0 0.0
  %264 = vmatpush1.msra.mxu0 %v235
  %265 = vmatprep.subr.mxu0 0.0
  %266 = vmatpush1.msra.mxu0 %v234
  %267 = vmatprep.subr.mxu0 0.0
  %268 = vmatpush1.msra.mxu0 %v233
  %269 = vmatprep.subr.mxu0 0.0
  %270 = vmatpush1.msra.mxu0 %v232
  %271 = vmatprep.subr.mxu0 0.0
  %272 = vmatpush1.msra.mxu0 %v231
  %273 = vmatprep.subr.mxu0 0.0
  %274 = vmatpush2.msra.mxu0 0.0
  %275 = vmatprep.subr.mxu0 0.0
  %276 = vmatpush2.msra.mxu0 0.0
  %277 = vmatprep.subr.mxu0 0.0
  %278 = vmatpush2.msra.mxu0 0.0
  %279 = vmatprep.subr.mxu0 0.0
  %280 = vmatpush2.msra.mxu0 0.0
  %281 = vmatprep.subr.mxu0 0.0
  %282 = vmatpush2.msra.mxu0 0.0
  %283 = vmatprep.subr.mxu0 0.0
  %284 = vmatpush2.msra.mxu0 0.0
  %285 = vmatprep.subr.mxu0 0.0
  %286 = vmatpush2.msra.mxu0 0.0
  %287 = vmatprep.subr.mxu0 0.0
  %288 = vmatpush2.msra.mxu0 0.0
  %289 = vmatprep.subr.mxu0 0.0
  %290 = vmatpush2.msra.mxu0 0.0
  %291 = vmatprep.subr.mxu0 0.0
  %292 = vmatpush2.msra.mxu0 0.0
  %293 = vmatprep.subr.mxu0 0.0
  %294 = vmatpush2.msra.mxu0 0.0
  %295 = vmatprep.subr.mxu0 0.0
  %296 = vmatpush2.msra.mxu0 0.0
  %297 = vmatprep.subr.mxu0 0.0
  %298 = vmatpush2.msra.mxu0 0.0
  %299 = vmatprep.subr.mxu0 0.0
  %300 = vmatpush2.msra.mxu0 0.0
  %301 = vmatprep.subr.mxu0 0.0
  %302 = vmatpush2.msra.mxu0 0.0
  %303 = vmatprep.subr.mxu0 0.0
  %304 = vmatpush2.msra.mxu0 0.0
  %305 = vmatprep.mubr.f32.mxu0 0.0
  %306 = vmatmul.mubr.f32.gmra.mxu0 %v43
  %v307 = vpop.f32.mrf.mxu0
  %v308 = vadd.f32 %v34, %v307
  %v309 = vpop.f32.mrf.mxu0
  %310 = vmatprep.mubr.f32.mxu0 0.0
  %311 = vmatmul.mubr.f32.gmra.mxu0 %v46
  %v312 = vpop.f32.mrf.mxu0
  %v313 = vadd.f32 %v39, %v312
  %v314 = vpop.f32.mrf.mxu0
  %315 = vdwg.mxu0
  %v316 = vsel %vm127, %v308, 0.0
  %317 = vadd.xlane.f32.xlu0 %v316
  %v318 = vpop.xlane.xlu0 %317
  %v319 = vsel %vm127, %v313, 0.0
  %320 = vadd.xlane.f32.xlu0 %v319
  %v321 = vpop.xlane.xlu0 %320
  %v322 = vadd.f32 %v228, %v318
  %v323 = vadd.f32 %v229, %v321
  %s324 = scalar_lea.vmem %s0, 168
  %v325 = vld [vmem:[%s324] sm:$0xff]
  %v326 = vld [vmem:[%s324 + $0x8] sm:$0xff]
  %v327 = vld [vmem:[%s324 + $0x10] sm:$0xff]
  %v328 = vld [vmem:[%s324 + $0x18] sm:$0xff]
  %v329 = vld [vmem:[%s324 + $0x20] sm:$0xff]
  %v330 = vld [vmem:[%s324 + $0x28] sm:$0xff]
  %v331 = vld [vmem:[%s324 + $0x30] sm:$0x3f]
  %v333 = vsel %vm48, %v331, 0
  %335 = vmatprep.subr.mxu0 0.0
  %336 = vmatpush1.msra.mxu0 0.0
  %337 = vmatprep.subr.mxu0 0.0
  %338 = vmatpush1.msra.mxu0 0.0
  %339 = vmatprep.subr.mxu0 0.0
  %340 = vmatpush1.msra.mxu0 0.0
  %341 = vmatprep.subr.mxu0 0.0
  %342 = vmatpush1.msra.mxu0 0.0
  %343 = vmatprep.subr.mxu0 0.0
  %344 = vmatpush1.msra.mxu0 0.0
  %345 = vmatprep.subr.mxu0 0.0
  %346 = vmatpush1.msra.mxu0 0.0
  %347 = vmatprep.subr.mxu0 0.0
  %348 = vmatpush1.msra.mxu0 0.0
  %349 = vmatprep.subr.mxu0 0.0
  %350 = vmatpush1.msra.mxu0 0.0
  %351 = vmatprep.subr.mxu0 0.0
  %352 = vmatpush1.msra.mxu0 0.0
  %353 = vmatprep.subr.mxu0 0.0
  %354 = vmatpush1.msra.mxu0 %v333
  %355 = vmatprep.subr.mxu0 0.0
  %356 = vmatpush1.msra.mxu0 %v330
  %357 = vmatprep.subr.mxu0 0.0
  %358 = vmatpush1.msra.mxu0 %v329
  %359 = vmatprep.subr.mxu0 0.0
  %360 = vmatpush1.msra.mxu0 %v328
  %361 = vmatprep.subr.mxu0 0.0
  %362 = vmatpush1.msra.mxu0 %v327
  %363 = vmatprep.subr.mxu0 0.0
  %364 = vmatpush1.msra.mxu0 %v326
  %365 = vmatprep.subr.mxu0 0.0
  %366 = vmatpush1.msra.mxu0 %v325
  %367 = vmatprep.subr.mxu0 0.0
  %368 = vmatpush2.msra.mxu0 0.0
  %369 = vmatprep.subr.mxu0 0.0
  %370 = vmatpush2.msra.mxu0 0.0
  %371 = vmatprep.subr.mxu0 0.0
  %372 = vmatpush2.msra.mxu0 0.0
  %373 = vmatprep.subr.mxu0 0.0
  %374 = vmatpush2.msra.mxu0 0.0
  %375 = vmatprep.subr.mxu0 0.0
  %376 = vmatpush2.msra.mxu0 0.0
  %377 = vmatprep.subr.mxu0 0.0
  %378 = vmatpush2.msra.mxu0 0.0
  %379 = vmatprep.subr.mxu0 0.0
  %380 = vmatpush2.msra.mxu0 0.0
  %381 = vmatprep.subr.mxu0 0.0
  %382 = vmatpush2.msra.mxu0 0.0
  %383 = vmatprep.subr.mxu0 0.0
  %384 = vmatpush2.msra.mxu0 0.0
  %385 = vmatprep.subr.mxu0 0.0
  %386 = vmatpush2.msra.mxu0 0.0
  %387 = vmatprep.subr.mxu0 0.0
  %388 = vmatpush2.msra.mxu0 0.0
  %389 = vmatprep.subr.mxu0 0.0
  %390 = vmatpush2.msra.mxu0 0.0
  %391 = vmatprep.subr.mxu0 0.0
  %392 = vmatpush2.msra.mxu0 0.0
  %393 = vmatprep.subr.mxu0 0.0
  %394 = vmatpush2.msra.mxu0 0.0
  %395 = vmatprep.subr.mxu0 0.0
  %396 = vmatpush2.msra.mxu0 0.0
  %397 = vmatprep.subr.mxu0 0.0
  %398 = vmatpush2.msra.mxu0 0.0
  %399 = vmatprep.mubr.f32.mxu0 0.0
  %400 = vmatmul.mubr.f32.gmra.mxu0 %v43
  %v401 = vpop.f32.mrf.mxu0
  %v402 = vadd.f32 %v34, %v401
  %v403 = vpop.f32.mrf.mxu0
  %404 = vmatprep.mubr.f32.mxu0 0.0
  %405 = vmatmul.mubr.f32.gmra.mxu0 %v46
  %v406 = vpop.f32.mrf.mxu0
  %v407 = vadd.f32 %v39, %v406
  %v408 = vpop.f32.mrf.mxu0
  %409 = vdwg.mxu0
  %v410 = vsel %vm127, %v402, 0.0
  %411 = vadd.xlane.f32.xlu0 %v410
  %v412 = vpop.xlane.xlu0 %411
  %v413 = vsel %vm127, %v407, 0.0
  %414 = vadd.xlane.f32.xlu0 %v413
  %v415 = vpop.xlane.xlu0 %414
  %v416 = vadd.f32 %v322, %v412
  %v417 = vadd.f32 %v323, %v415
  %s418 = scalar_lea.vmem %s0, 224
  %v419 = vld [vmem:[%s418] sm:$0xff]
  %v420 = vld [vmem:[%s418 + $0x8] sm:$0xff]
  %v421 = vld [vmem:[%s418 + $0x10] sm:$0xff]
  %v422 = vld [vmem:[%s418 + $0x18] sm:$0xff]
  %v423 = vld [vmem:[%s418 + $0x20] sm:$0xff]
  %v424 = vld [vmem:[%s418 + $0x28] sm:$0xff]
  %v425 = vld [vmem:[%s418 + $0x30] sm:$0x3f]
  %v427 = vsel %vm48, %v425, 0
  %429 = vmatprep.subr.mxu0 0.0
  %430 = vmatpush1.msra.mxu0 0.0
  %431 = vmatprep.subr.mxu0 0.0
  %432 = vmatpush1.msra.mxu0 0.0
  %433 = vmatprep.subr.mxu0 0.0
  %434 = vmatpush1.msra.mxu0 0.0
  %435 = vmatprep.subr.mxu0 0.0
  %436 = vmatpush1.msra.mxu0 0.0
  %437 = vmatprep.subr.mxu0 0.0
  %438 = vmatpush1.msra.mxu0 0.0
  %439 = vmatprep.subr.mxu0 0.0
  %440 = vmatpush1.msra.mxu0 0.0
  %441 = vmatprep.subr.mxu0 0.0
  %442 = vmatpush1.msra.mxu0 0.0
  %443 = vmatprep.subr.mxu0 0.0
  %444 = vmatpush1.msra.mxu0 0.0
  %445 = vmatprep.subr.mxu0 0.0
  %446 = vmatpush1.msra.mxu0 0.0
  %447 = vmatprep.subr.mxu0 0.0
  %448 = vmatpush1.msra.mxu0 %v427
  %449 = vmatprep.subr.mxu0 0.0
  %450 = vmatpush1.msra.mxu0 %v424
  %451 = vmatprep.subr.mxu0 0.0
  %452 = vmatpush1.msra.mxu0 %v423
  %453 = vmatprep.subr.mxu0 0.0
  %454 = vmatpush1.msra.mxu0 %v422
  %455 = vmatprep.subr.mxu0 0.0
  %456 = vmatpush1.msra.mxu0 %v421
  %457 = vmatprep.subr.mxu0 0.0
  %458 = vmatpush1.msra.mxu0 %v420
  %459 = vmatprep.subr.mxu0 0.0
  %460 = vmatpush1.msra.mxu0 %v419
  %461 = vmatprep.subr.mxu0 0.0
  %462 = vmatpush2.msra.mxu0 0.0
  %463 = vmatprep.subr.mxu0 0.0
  %464 = vmatpush2.msra.mxu0 0.0
  %465 = vmatprep.subr.mxu0 0.0
  %466 = vmatpush2.msra.mxu0 0.0
  %467 = vmatprep.subr.mxu0 0.0
  %468 = vmatpush2.msra.mxu0 0.0
  %469 = vmatprep.subr.mxu0 0.0
  %470 = vmatpush2.msra.mxu0 0.0
  %471 = vmatprep.subr.mxu0 0.0
  %472 = vmatpush2.msra.mxu0 0.0
  %473 = vmatprep.subr.mxu0 0.0
  %474 = vmatpush2.msra.mxu0 0.0
  %475 = vmatprep.subr.mxu0 0.0
  %476 = vmatpush2.msra.mxu0 0.0
  %477 = vmatprep.subr.mxu0 0.0
  %478 = vmatpush2.msra.mxu0 0.0
  %479 = vmatprep.subr.mxu0 0.0
  %480 = vmatpush2.msra.mxu0 0.0
  %481 = vmatprep.subr.mxu0 0.0
  %482 = vmatpush2.msra.mxu0 0.0
  %483 = vmatprep.subr.mxu0 0.0
  %484 = vmatpush2.msra.mxu0 0.0
  %485 = vmatprep.subr.mxu0 0.0
  %486 = vmatpush2.msra.mxu0 0.0
  %487 = vmatprep.subr.mxu0 0.0
  %488 = vmatpush2.msra.mxu0 0.0
  %489 = vmatprep.subr.mxu0 0.0
  %490 = vmatpush2.msra.mxu0 0.0
  %491 = vmatprep.subr.mxu0 0.0
  %492 = vmatpush2.msra.mxu0 0.0
  %493 = vmatprep.mubr.f32.mxu0 0.0
  %494 = vmatmul.mubr.f32.gmra.mxu0 %v43
  %v495 = vpop.f32.mrf.mxu0
  %v496 = vadd.f32 %v34, %v495
  %v497 = vpop.f32.mrf.mxu0
  %498 = vmatprep.mubr.f32.mxu0 0.0
  %499 = vmatmul.mubr.f32.gmra.mxu0 %v46
  %v500 = vpop.f32.mrf.mxu0
  %v501 = vadd.f32 %v39, %v500
  %v502 = vpop.f32.mrf.mxu0
  %503 = vdwg.mxu0
  %v504 = vsel %vm127, %v496, 0.0
  %505 = vadd.xlane.f32.xlu0 %v504
  %v506 = vpop.xlane.xlu0 %505
  %v507 = vsel %vm127, %v501, 0.0
  %508 = vadd.xlane.f32.xlu0 %v507
  %v509 = vpop.xlane.xlu0 %508
  %v510 = vadd.f32 %v416, %v506
  %v511 = vadd.f32 %v417, %v509
  %s512 = scalar_lea.vmem %s0, 280
  %v513 = vld [vmem:[%s512] sm:$0xff]
  %v514 = vld [vmem:[%s512 + $0x8] sm:$0xff]
  %v515 = vld [vmem:[%s512 + $0x10] sm:$0xff]
  %v516 = vld [vmem:[%s512 + $0x18] sm:$0xff]
  %v517 = vld [vmem:[%s512 + $0x20] sm:$0xff]
  %v518 = vld [vmem:[%s512 + $0x28] sm:$0xff]
  %v519 = vld [vmem:[%s512 + $0x30] sm:$0x3f]
  %v521 = vsel %vm48, %v519, 0
  %523 = vmatprep.subr.mxu0 0.0
  %524 = vmatpush1.msra.mxu0 0.0
  %525 = vmatprep.subr.mxu0 0.0
  %526 = vmatpush1.msra.mxu0 0.0
  %527 = vmatprep.subr.mxu0 0.0
  %528 = vmatpush1.msra.mxu0 0.0
  %529 = vmatprep.subr.mxu0 0.0
  %530 = vmatpush1.msra.mxu0 0.0
  %531 = vmatprep.subr.mxu0 0.0
  %532 = vmatpush1.msra.mxu0 0.0
  %533 = vmatprep.subr.mxu0 0.0
  %534 = vmatpush1.msra.mxu0 0.0
  %535 = vmatprep.subr.mxu0 0.0
  %536 = vmatpush1.msra.mxu0 0.0
  %537 = vmatprep.subr.mxu0 0.0
  %538 = vmatpush1.msra.mxu0 0.0
  %539 = vmatprep.subr.mxu0 0.0
  %540 = vmatpush1.msra.mxu0 0.0
  %541 = vmatprep.subr.mxu0 0.0
  %542 = vmatpush1.msra.mxu0 %v521
  %543 = vmatprep.subr.mxu0 0.0
  %544 = vmatpush1.msra.mxu0 %v518
  %545 = vmatprep.subr.mxu0 0.0
  %546 = vmatpush1.msra.mxu0 %v517
  %547 = vmatprep.subr.mxu0 0.0
  %548 = vmatpush1.msra.mxu0 %v516
  %549 = vmatprep.subr.mxu0 0.0
  %550 = vmatpush1.msra.mxu0 %v515
  %551 = vmatprep.subr.mxu0 0.0
  %552 = vmatpush1.msra.mxu0 %v514
  %553 = vmatprep.subr.mxu0 0.0
  %554 = vmatpush1.msra.mxu0 %v513
  %555 = vmatprep.subr.mxu0 0.0
  %556 = vmatpush2.msra.mxu0 0.0
  %557 = vmatprep.subr.mxu0 0.0
  %558 = vmatpush2.msra.mxu0 0.0
  %559 = vmatprep.subr.mxu0 0.0
  %560 = vmatpush2.msra.mxu0 0.0
  %561 = vmatprep.subr.mxu0 0.0
  %562 = vmatpush2.msra.mxu0 0.0
  %563 = vmatprep.subr.mxu0 0.0
  %564 = vmatpush2.msra.mxu0 0.0
  %565 = vmatprep.subr.mxu0 0.0
  %566 = vmatpush2.msra.mxu0 0.0
  %567 = vmatprep.subr.mxu0 0.0
  %568 = vmatpush2.msra.mxu0 0.0
  %569 = vmatprep.subr.mxu0 0.0
  %570 = vmatpush2.msra.mxu0 0.0
  %571 = vmatprep.subr.mxu0 0.0
  %572 = vmatpush2.msra.mxu0 0.0
  %573 = vmatprep.subr.mxu0 0.0
  %574 = vmatpush2.msra.mxu0 0.0
  %575 = vmatprep.subr.mxu0 0.0
  %576 = vmatpush2.msra.mxu0 0.0
  %577 = vmatprep.subr.mxu0 0.0
  %578 = vmatpush2.msra.mxu0 0.0
  %579 = vmatprep.subr.mxu0 0.0
  %580 = vmatpush2.msra.mxu0 0.0
  %581 = vmatprep.subr.mxu0 0.0
  %582 = vmatpush2.msra.mxu0 0.0
  %583 = vmatprep.subr.mxu0 0.0
  %584 = vmatpush2.msra.mxu0 0.0
  %585 = vmatprep.subr.mxu0 0.0
  %586 = vmatpush2.msra.mxu0 0.0
  %587 = vmatprep.mubr.f32.mxu0 0.0
  %588 = vmatmul.mubr.f32.gmra.mxu0 %v43
  %v589 = vpop.f32.mrf.mxu0
  %v590 = vadd.f32 %v34, %v589
  %v591 = vpop.f32.mrf.mxu0
  %592 = vmatprep.mubr.f32.mxu0 0.0
  %593 = vmatmul.mubr.f32.gmra.mxu0 %v46
  %v594 = vpop.f32.mrf.mxu0
  %v595 = vadd.f32 %v39, %v594
  %v596 = vpop.f32.mrf.mxu0
  %597 = vdwg.mxu0
  %v598 = vsel %vm127, %v590, 0.0
  %599 = vadd.xlane.f32.xlu0 %v598
  %v600 = vpop.xlane.xlu0 %599
  %v601 = vsel %vm127, %v595, 0.0
  %602 = vadd.xlane.f32.xlu0 %v601
  %v603 = vpop.xlane.xlu0 %602
  %v604 = vadd.f32 %v510, %v600
  %v605 = vadd.f32 %v511, %v603
  %s606 = scalar_lea.vmem %s0, 336
  %v607 = vld [vmem:[%s606] sm:$0xff]
  %v608 = vld [vmem:[%s606 + $0x8] sm:$0xff]
  %v609 = vld [vmem:[%s606 + $0x10] sm:$0xff]
  %v610 = vld [vmem:[%s606 + $0x18] sm:$0xff]
  %v611 = vld [vmem:[%s606 + $0x20] sm:$0xff]
  %v612 = vld [vmem:[%s606 + $0x28] sm:$0xff]
  %v613 = vld [vmem:[%s606 + $0x30] sm:$0x3f]
  %v615 = vsel %vm48, %v613, 0
  %617 = vmatprep.subr.mxu0 0.0
  %618 = vmatpush1.msra.mxu0 0.0
  %619 = vmatprep.subr.mxu0 0.0
  %620 = vmatpush1.msra.mxu0 0.0
  %621 = vmatprep.subr.mxu0 0.0
  %622 = vmatpush1.msra.mxu0 0.0
  %623 = vmatprep.subr.mxu0 0.0
  %624 = vmatpush1.msra.mxu0 0.0
  %625 = vmatprep.subr.mxu0 0.0
  %626 = vmatpush1.msra.mxu0 0.0
  %627 = vmatprep.subr.mxu0 0.0
  %628 = vmatpush1.msra.mxu0 0.0
  %629 = vmatprep.subr.mxu0 0.0
  %630 = vmatpush1.msra.mxu0 0.0
  %631 = vmatprep.subr.mxu0 0.0
  %632 = vmatpush1.msra.mxu0 0.0
  %633 = vmatprep.subr.mxu0 0.0
  %634 = vmatpush1.msra.mxu0 0.0
  %635 = vmatprep.subr.mxu0 0.0
  %636 = vmatpush1.msra.mxu0 %v615
  %637 = vmatprep.subr.mxu0 0.0
  %638 = vmatpush1.msra.mxu0 %v612
  %639 = vmatprep.subr.mxu0 0.0
  %640 = vmatpush1.msra.mxu0 %v611
  %641 = vmatprep.subr.mxu0 0.0
  %642 = vmatpush1.msra.mxu0 %v610
  %643 = vmatprep.subr.mxu0 0.0
  %644 = vmatpush1.msra.mxu0 %v609
  %645 = vmatprep.subr.mxu0 0.0
  %646 = vmatpush1.msra.mxu0 %v608
  %647 = vmatprep.subr.mxu0 0.0
  %648 = vmatpush1.msra.mxu0 %v607
  %649 = vmatprep.subr.mxu0 0.0
  %650 = vmatpush2.msra.mxu0 0.0
  %651 = vmatprep.subr.mxu0 0.0
  %652 = vmatpush2.msra.mxu0 0.0
  %653 = vmatprep.subr.mxu0 0.0
  %654 = vmatpush2.msra.mxu0 0.0
  %655 = vmatprep.subr.mxu0 0.0
  %656 = vmatpush2.msra.mxu0 0.0
  %657 = vmatprep.subr.mxu0 0.0
  %658 = vmatpush2.msra.mxu0 0.0
  %659 = vmatprep.subr.mxu0 0.0
  %660 = vmatpush2.msra.mxu0 0.0
  %661 = vmatprep.subr.mxu0 0.0
  %662 = vmatpush2.msra.mxu0 0.0
  %663 = vmatprep.subr.mxu0 0.0
  %664 = vmatpush2.msra.mxu0 0.0
  %665 = vmatprep.subr.mxu0 0.0
  %666 = vmatpush2.msra.mxu0 0.0
  %667 = vmatprep.subr.mxu0 0.0
  %668 = vmatpush2.msra.mxu0 0.0
  %669 = vmatprep.subr.mxu0 0.0
  %670 = vmatpush2.msra.mxu0 0.0
  %671 = vmatprep.subr.mxu0 0.0
  %672 = vmatpush2.msra.mxu0 0.0
  %673 = vmatprep.subr.mxu0 0.0
  %674 = vmatpush2.msra.mxu0 0.0
  %675 = vmatprep.subr.mxu0 0.0
  %676 = vmatpush2.msra.mxu0 0.0
  %677 = vmatprep.subr.mxu0 0.0
  %678 = vmatpush2.msra.mxu0 0.0
  %679 = vmatprep.subr.mxu0 0.0
  %680 = vmatpush2.msra.mxu0 0.0
  %681 = vmatprep.mubr.f32.mxu0 0.0
  %682 = vmatmul.mubr.f32.gmra.mxu0 %v43
  %v683 = vpop.f32.mrf.mxu0
  %v684 = vadd.f32 %v34, %v683
  %v685 = vpop.f32.mrf.mxu0
  %686 = vmatprep.mubr.f32.mxu0 0.0
  %687 = vmatmul.mubr.f32.gmra.mxu0 %v46
  %v688 = vpop.f32.mrf.mxu0
  %v689 = vadd.f32 %v39, %v688
  %v690 = vpop.f32.mrf.mxu0
  %691 = vdwg.mxu0
  %v692 = vsel %vm127, %v684, 0.0
  %693 = vadd.xlane.f32.xlu0 %v692
  %v694 = vpop.xlane.xlu0 %693
  %v695 = vsel %vm127, %v689, 0.0
  %696 = vadd.xlane.f32.xlu0 %v695
  %v697 = vpop.xlane.xlu0 %696
  %v698 = vadd.f32 %v604, %v694
  %v699 = vadd.f32 %v605, %v697
  %s700 = scalar_lea.vmem %s0, 392
  %v701 = vld [vmem:[%s700] sm:$0xff]
  %v702 = vld [vmem:[%s700 + $0x8] sm:$0xff]
  %v703 = vld [vmem:[%s700 + $0x10] sm:$0xff]
  %v704 = vld [vmem:[%s700 + $0x18] sm:$0xff]
  %v705 = vld [vmem:[%s700 + $0x20] sm:$0xff]
  %v706 = vld [vmem:[%s700 + $0x28] sm:$0xff]
  %v707 = vld [vmem:[%s700 + $0x30] sm:$0x3f]
  %v709 = vsel %vm48, %v707, 0
  %711 = vmatprep.subr.mxu0 0.0
  %712 = vmatpush1.msra.mxu0 0.0
  %713 = vmatprep.subr.mxu0 0.0
  %714 = vmatpush1.msra.mxu0 0.0
  %715 = vmatprep.subr.mxu0 0.0
  %716 = vmatpush1.msra.mxu0 0.0
  %717 = vmatprep.subr.mxu0 0.0
  %718 = vmatpush1.msra.mxu0 0.0
  %719 = vmatprep.subr.mxu0 0.0
  %720 = vmatpush1.msra.mxu0 0.0
  %721 = vmatprep.subr.mxu0 0.0
  %722 = vmatpush1.msra.mxu0 0.0
  %723 = vmatprep.subr.mxu0 0.0
  %724 = vmatpush1.msra.mxu0 0.0
  %725 = vmatprep.subr.mxu0 0.0
  %726 = vmatpush1.msra.mxu0 0.0
  %727 = vmatprep.subr.mxu0 0.0
  %728 = vmatpush1.msra.mxu0 0.0
  %729 = vmatprep.subr.mxu0 0.0
  %730 = vmatpush1.msra.mxu0 %v709
  %731 = vmatprep.subr.mxu0 0.0
  %732 = vmatpush1.msra.mxu0 %v706
  %733 = vmatprep.subr.mxu0 0.0
  %734 = vmatpush1.msra.mxu0 %v705
  %735 = vmatprep.subr.mxu0 0.0
  %736 = vmatpush1.msra.mxu0 %v704
  %737 = vmatprep.subr.mxu0 0.0
  %738 = vmatpush1.msra.mxu0 %v703
  %739 = vmatprep.subr.mxu0 0.0
  %740 = vmatpush1.msra.mxu0 %v702
  %741 = vmatprep.subr.mxu0 0.0
  %742 = vmatpush1.msra.mxu0 %v701
  %743 = vmatprep.subr.mxu0 0.0
  %744 = vmatpush2.msra.mxu0 0.0
  %745 = vmatprep.subr.mxu0 0.0
  %746 = vmatpush2.msra.mxu0 0.0
  %747 = vmatprep.subr.mxu0 0.0
  %748 = vmatpush2.msra.mxu0 0.0
  %749 = vmatprep.subr.mxu0 0.0
  %750 = vmatpush2.msra.mxu0 0.0
  %751 = vmatprep.subr.mxu0 0.0
  %752 = vmatpush2.msra.mxu0 0.0
  %753 = vmatprep.subr.mxu0 0.0
  %754 = vmatpush2.msra.mxu0 0.0
  %755 = vmatprep.subr.mxu0 0.0
  %756 = vmatpush2.msra.mxu0 0.0
  %757 = vmatprep.subr.mxu0 0.0
  %758 = vmatpush2.msra.mxu0 0.0
  %759 = vmatprep.subr.mxu0 0.0
  %760 = vmatpush2.msra.mxu0 0.0
  %761 = vmatprep.subr.mxu0 0.0
  %762 = vmatpush2.msra.mxu0 0.0
  %763 = vmatprep.subr.mxu0 0.0
  %764 = vmatpush2.msra.mxu0 0.0
  %765 = vmatprep.subr.mxu0 0.0
  %766 = vmatpush2.msra.mxu0 0.0
  %767 = vmatprep.subr.mxu0 0.0
  %768 = vmatpush2.msra.mxu0 0.0
  %769 = vmatprep.subr.mxu0 0.0
  %770 = vmatpush2.msra.mxu0 0.0
  %771 = vmatprep.subr.mxu0 0.0
  %772 = vmatpush2.msra.mxu0 0.0
  %773 = vmatprep.subr.mxu0 0.0
  %774 = vmatpush2.msra.mxu0 0.0
  %775 = vmatprep.mubr.f32.mxu0 0.0
  %776 = vmatmul.mubr.f32.gmra.mxu0 %v43
  %v777 = vpop.f32.mrf.mxu0
  %v778 = vadd.f32 %v34, %v777
  %v779 = vpop.f32.mrf.mxu0
  %780 = vmatprep.mubr.f32.mxu0 0.0
  %781 = vmatmul.mubr.f32.gmra.mxu0 %v46
  %v782 = vpop.f32.mrf.mxu0
  %v783 = vadd.f32 %v39, %v782
  %v784 = vpop.f32.mrf.mxu0
  %785 = vdwg.mxu0
  %v786 = vsel %vm127, %v778, 0.0
  %787 = vadd.xlane.f32.xlu0 %v786
  %v788 = vpop.xlane.xlu0 %787
  %v789 = vsel %vm127, %v783, 0.0
  %790 = vadd.xlane.f32.xlu0 %v789
  %v791 = vpop.xlane.xlu0 %790
  %v792 = vadd.f32 %v698, %v788
  %v793 = vadd.f32 %v699, %v791
  %v794 = vmul.f32 %v792, 0.0015432099
  %v795 = vmul.f32 %v793, 0.0015432099
  %v796 = vsub.f32 %v119, %v794
  %v797 = vsub.f32 %v124, %v795
  %v798 = vmul.f32 %v796, %v796
  %v799 = vmul.f32 %v797, %v797
  %v800 = vsel %vm127, %v798, 0.0
  %801 = vadd.xlane.f32.xlu0 %v800
  %v802 = vpop.xlane.xlu0 %801
  %v803 = vsel %vm127, %v799, 0.0
  %804 = vadd.xlane.f32.xlu0 %v803
  %v805 = vpop.xlane.xlu0 %804
  %v806 = vadd.f32 %v802, 0.0
  %v807 = vadd.f32 %v805, 0.0
  %v808 = vsub.f32 %v214, %v794
  %v809 = vsub.f32 %v219, %v795
  %v810 = vmul.f32 %v808, %v808
  %v811 = vmul.f32 %v809, %v809
  %v812 = vsel %vm127, %v810, 0.0
  %813 = vadd.xlane.f32.xlu0 %v812
  %v814 = vpop.xlane.xlu0 %813
  %v815 = vsel %vm127, %v811, 0.0
  %816 = vadd.xlane.f32.xlu0 %v815
  %v817 = vpop.xlane.xlu0 %816
  %v818 = vadd.f32 %v806, %v814
  %v819 = vadd.f32 %v807, %v817
  %v820 = vsub.f32 %v308, %v794
  %v821 = vsub.f32 %v313, %v795
  %v822 = vmul.f32 %v820, %v820
  %v823 = vmul.f32 %v821, %v821
  %v824 = vsel %vm127, %v822, 0.0
  %825 = vadd.xlane.f32.xlu0 %v824
  %v826 = vpop.xlane.xlu0 %825
  %v827 = vsel %vm127, %v823, 0.0
  %828 = vadd.xlane.f32.xlu0 %v827
  %v829 = vpop.xlane.xlu0 %828
  %v830 = vadd.f32 %v818, %v826
  %v831 = vadd.f32 %v819, %v829
  %v832 = vsub.f32 %v402, %v794
  %v833 = vsub.f32 %v407, %v795
  %v834 = vmul.f32 %v832, %v832
  %v835 = vmul.f32 %v833, %v833
  %v836 = vsel %vm127, %v834, 0.0
  %837 = vadd.xlane.f32.xlu0 %v836
  %v838 = vpop.xlane.xlu0 %837
  %v839 = vsel %vm127, %v835, 0.0
  %840 = vadd.xlane.f32.xlu0 %v839
  %v841 = vpop.xlane.xlu0 %840
  %v842 = vadd.f32 %v830, %v838
  %v843 = vadd.f32 %v831, %v841
  %v844 = vsub.f32 %v496, %v794
  %v845 = vsub.f32 %v501, %v795
  %v846 = vmul.f32 %v844, %v844
  %v847 = vmul.f32 %v845, %v845
  %v848 = vsel %vm127, %v846, 0.0
  %849 = vadd.xlane.f32.xlu0 %v848
  %v850 = vpop.xlane.xlu0 %849
  %v851 = vsel %vm127, %v847, 0.0
  %852 = vadd.xlane.f32.xlu0 %v851
  %v853 = vpop.xlane.xlu0 %852
  %v854 = vadd.f32 %v842, %v850
  %v855 = vadd.f32 %v843, %v853
  %v856 = vsub.f32 %v590, %v794
  %v857 = vsub.f32 %v595, %v795
  %v858 = vmul.f32 %v856, %v856
  %v859 = vmul.f32 %v857, %v857
  %v860 = vsel %vm127, %v858, 0.0
  %861 = vadd.xlane.f32.xlu0 %v860
  %v862 = vpop.xlane.xlu0 %861
  %v863 = vsel %vm127, %v859, 0.0
  %864 = vadd.xlane.f32.xlu0 %v863
  %v865 = vpop.xlane.xlu0 %864
  %v866 = vadd.f32 %v854, %v862
  %v867 = vadd.f32 %v855, %v865
  %v868 = vsub.f32 %v684, %v794
  %v869 = vsub.f32 %v689, %v795
  %v870 = vmul.f32 %v868, %v868
  %v871 = vmul.f32 %v869, %v869
  %v872 = vsel %vm127, %v870, 0.0
  %873 = vadd.xlane.f32.xlu0 %v872
  %v874 = vpop.xlane.xlu0 %873
  %v875 = vsel %vm127, %v871, 0.0
  %876 = vadd.xlane.f32.xlu0 %v875
  %v877 = vpop.xlane.xlu0 %876
  %v878 = vadd.f32 %v866, %v874
  %v879 = vadd.f32 %v867, %v877
  %v880 = vsub.f32 %v778, %v794
  %v881 = vsub.f32 %v783, %v795
  %v882 = vmul.f32 %v880, %v880
  %v883 = vmul.f32 %v881, %v881
  %v884 = vsel %vm127, %v882, 0.0
  %885 = vadd.xlane.f32.xlu0 %v884
  %v886 = vpop.xlane.xlu0 %885
  %v887 = vsel %vm127, %v883, 0.0
  %888 = vadd.xlane.f32.xlu0 %v887
  %v889 = vpop.xlane.xlu0 %888
  %v890 = vadd.f32 %v878, %v886
  %v891 = vadd.f32 %v879, %v889
  %v892 = vmul.f32 %v890, 0.0015432099
  %v893 = vmul.f32 %v891, 0.0015432099
  %v894 = vadd.f32 %v892, 1e-05
  %v895 = vadd.f32 %v893, 1e-05
  %v896 = vrsqrt.pop %v894
  %v897 = vrsqrt.pop %v895
  %v898 = vmul.f32 %v19, %v896
  %v899 = vmul.f32 %v20, %v897
  %v900 = vmul.f32 %v794, %v898
  %v901 = vmul.f32 %v795, %v899
  %v902 = vsub.f32 %v22, %v900
  %v903 = vsub.f32 %v23, %v901
  %905 = vset.pattern.permute.xlu0 0
  %906 = vperm.xlu0 %905, %v898
  %v907 = vpop.permute.xlu0 %906
  %910 = vset.pattern.permute.xlu0 0
  %911 = vperm.xlu0 %910, %v899
  %v912 = vpop.permute.xlu0 %911
  %v914 = vmul.f32 %v119, %v907
  %v915 = vmul.f32 %v124, %v912
  %917 = vset.pattern.permute.xlu0 0
  %918 = vperm.xlu0 %917, %v902
  %v919 = vpop.permute.xlu0 %918
  %922 = vset.pattern.permute.xlu0 0
  %923 = vperm.xlu0 %922, %v903
  %v924 = vpop.permute.xlu0 %923
  %v926 = vadd.f32 %v914, %v919
  %v927 = vadd.f32 %v915, %v924
  %v928 = vmax.f32 %v926, 0.0
  %v929 = vmax.f32 %v927, 0.0
  %v930 = vmul.f32 %v308, %v907
  %v931 = vmul.f32 %v313, %v912
  %v932 = vadd.f32 %v930, %v919
  %v933 = vadd.f32 %v931, %v924
  %v934 = vmax.f32 %v932, 0.0
  %v935 = vmax.f32 %v933, 0.0
  %v936 = vmul.f32 %v496, %v907
  %v937 = vmul.f32 %v501, %v912
  %v938 = vadd.f32 %v936, %v919
  %v939 = vadd.f32 %v937, %v924
  %v940 = vmax.f32 %v938, 0.0
  %v941 = vmax.f32 %v939, 0.0
  %v942 = vmul.f32 %v684, %v907
  %v943 = vmul.f32 %v689, %v912
  %v944 = vadd.f32 %v942, %v919
  %v945 = vadd.f32 %v943, %v924
  %v946 = vmax.f32 %v944, 0.0
  %v947 = vmax.f32 %v945, 0.0
  %v948 = vmax.f32 %v928, %v934
  %v949 = vmax.f32 %v929, %v935
  %v950 = vmax.f32 %v940, %v946
  %v951 = vmax.f32 %v941, %v947
  %v952 = vmax.f32 %v948, %v950
  %v953 = vmax.f32 %v949, %v951
  %954 = vst.msk [vmem:[%s3] sm:$0xff] %vm127, %v952
  %955 = vst.msk [vmem:[%s3 + $0x8] sm:$0xff] %vm127, %v953
  %v956 = vmul.f32 %v214, %v907
  %v957 = vmul.f32 %v219, %v912
  %v958 = vadd.f32 %v956, %v919
  %v959 = vadd.f32 %v957, %v924
  %v960 = vmax.f32 %v958, 0.0
  %v961 = vmax.f32 %v959, 0.0
  %v962 = vmul.f32 %v402, %v907
  %v963 = vmul.f32 %v407, %v912
  %v964 = vadd.f32 %v962, %v919
  %v965 = vadd.f32 %v963, %v924
  %v966 = vmax.f32 %v964, 0.0
  %v967 = vmax.f32 %v965, 0.0
  %v968 = vmul.f32 %v590, %v907
  %v969 = vmul.f32 %v595, %v912
  %v970 = vadd.f32 %v968, %v919
  %v971 = vadd.f32 %v969, %v924
  %v972 = vmax.f32 %v970, 0.0
  %v973 = vmax.f32 %v971, 0.0
  %v974 = vmul.f32 %v778, %v907
  %v975 = vmul.f32 %v783, %v912
  %v976 = vadd.f32 %v974, %v919
  %v977 = vadd.f32 %v975, %v924
  %v978 = vmax.f32 %v976, 0.0
  %v979 = vmax.f32 %v977, 0.0
  %v980 = vmax.f32 %v960, %v966
  %v981 = vmax.f32 %v961, %v967
  %v982 = vmax.f32 %v972, %v978
  %v983 = vmax.f32 %v973, %v979
  %v984 = vmax.f32 %v980, %v982
  %v985 = vmax.f32 %v981, %v983
  %s986 = scalar_lea.vmem %s3, 16
  %987 = vst.msk [vmem:[%s986] sm:$0xff] %vm127, %v984
  %988 = vst.msk [vmem:[%s986 + $0x8] sm:$0xff] %vm127, %v985
  // Predicated region
  $region14: #{_lambda_.3} parent=0 // pred_check
    _
  $region15: #{_lambda_.3} parent=0 // pred_check_branch
    %990 = sbr.rel (0) target = $region17
  $region16: #{_lambda_.3} parent=0 // pred_region
    _
  $region17: #{_lambda_.3} parent=0 // pred_fallthru
    _
  // Predicated region
  $region18: #{_lambda_.3} parent=0 // pred_check
    _
  $region19: #{_lambda_.3} parent=0 // pred_check_branch
    %992 = sbr.rel (0) target = $region21
  $region20: #{_lambda_.3} parent=0 // pred_region
    _
  $region21: #{_lambda_.3} parent=0 // pred_fallthru
    _

// kernel: _lambda_.4
$region0: #{_lambda_.4}
  #allocation0 [shape = 'u32[]', space=smem, size = 0x4, offset = 0x4, fixed_abs, tag = 'smem constant byte address 0x4 - core index']
  #allocation1 [shape = 'u32[144,128]{1,0:T(1,128)}', space=vmem, size = 0x12000, scoped, tag = 'internal scratch']
  %s0 = inlined_call_operand.vmem [shape: f32[2,144,16], index: 0, kind: input, shape index: {}]
  %s1 = inlined_call_operand.vmem [shape: f32[32,144], index: 1, kind: input, shape index: {}]
  %s2 = inlined_call_operand.vmem [shape: f32[3,32,1], index: 2, kind: input, shape index: {}]
  %s3 = inlined_call_operand.vmem [shape: f32[48,32], index: 3, kind: input, shape index: {}]
  %s4 = inlined_call_operand.vmem [shape: f32[48,1], index: 4, kind: input, shape index: {}]
  %s5 = inlined_call_operand.vmem [shape: f32[2,32,16], index: 5, kind: output, shape index: {0}]
  %s6 = inlined_call_operand.vmem [shape: f32[2,8,16], index: 6, kind: output, shape index: {1}]
  %s7 = inlined_call_operand.vmem [shape: f32[2,8,16], index: 7, kind: output, shape index: {2}]
  %8 = xla_tuple %s5, %s6, %s7
  %s9 = sld [smem:[#allocation0]]
  $region46: #{_lambda_.4} parent=0
    _
  %s11 = ssub.s32 1, %s9
  %s12 = scalar_select 0, %s11, %s9
  // Predicated region
  $region2: #{_lambda_.4} parent=0 // pred_check
    _
  $region3: #{_lambda_.4} parent=0 // pred_check_branch
    %14 = sbr.rel (0) target = $region5
  $region4: #{_lambda_.4} parent=0 // pred_region
    _
  $region5: #{_lambda_.4} parent=0 // pred_fallthru
    _
  // Predicated region
  $region6: #{_lambda_.4} parent=0 // pred_check
    _
  $region7: #{_lambda_.4} parent=0 // pred_check_branch
    %16 = sbr.rel (0) target = $region9
  $region8: #{_lambda_.4} parent=0 // pred_region
    _
  $region9: #{_lambda_.4} parent=0 // pred_fallthru
    _
  // Predicated region
  $region10: #{_lambda_.4} parent=0 // pred_check
    _
  $region11: #{_lambda_.4} parent=0 // pred_check_branch
    %18 = sbr.rel (0) target = $region13
  $region12: #{_lambda_.4} parent=0 // pred_region
    _
  $region13: #{_lambda_.4} parent=0 // pred_fallthru
    _
  // Predicated region
  $region14: #{_lambda_.4} parent=0 // pred_check
    _
  $region15: #{_lambda_.4} parent=0 // pred_check_branch
    %20 = sbr.rel (0) target = $region17
  $region16: #{_lambda_.4} parent=0 // pred_region
    _
  $region17: #{_lambda_.4} parent=0 // pred_fallthru
    _
  // Predicated region
  $region18: #{_lambda_.4} parent=0 // pred_check
    _
  $region19: #{_lambda_.4} parent=0 // pred_check_branch
    %22 = sbr.rel (0) target = $region21
  $region20: #{_lambda_.4} parent=0 // pred_region
    _
  $region21: #{_lambda_.4} parent=0 // pred_fallthru
    _
  %v23 = vld [vmem:[%s1] sm:$0xff]
  %v24 = vld [vmem:[%s1 + $0x8] sm:$0xff]
  %v25 = vld [vmem:[%s1 + $0x10] sm:$0xff]
  %v26 = vld [vmem:[%s1 + $0x18] sm:$0xff]
  %v27 = vld [vmem:[%s1 + $0x20] sm:$0xff]
  %v28 = vld [vmem:[%s1 + $0x28] sm:$0xff]
  %v29 = vld [vmem:[%s1 + $0x30] sm:$0xff]
  %v30 = vld [vmem:[%s1 + $0x38] sm:$0xff]
  %v31 = vld [vmem:[%s2] sm:$0xff]
  %v32 = vld [vmem:[%s2 + $0x8] sm:$0xff]
  %v33 = vld [vmem:[%s2 + $0x10] sm:$0xff]
  %v34 = vld [vmem:[%s2 + $0x18] sm:$0xff]
  %s35 = scalar_lea.vmem %s2, 32
  %v36 = vld [vmem:[%s35] sm:$0xff]
  %v37 = vld [vmem:[%s35 + $0x8] sm:$0xff]
  %v38 = vld [vmem:[%s35 + $0x10] sm:$0xff]
  %v39 = vld [vmem:[%s35 + $0x18] sm:$0xff]
  %s40 = scalar_lea.vmem %s2, 64
  %v41 = vld [vmem:[%s40] sm:$0xff]
  %v42 = vld [vmem:[%s40 + $0x8] sm:$0xff]
  %v43 = vld [vmem:[%s40 + $0x10] sm:$0xff]
  %v44 = vld [vmem:[%s40 + $0x18] sm:$0xff]
  %v45 = vld [vmem:[%s3] sm:$0xff]
  %v46 = vld [vmem:[%s3 + $0x8] sm:$0xff]
  %v47 = vld [vmem:[%s3 + $0x10] sm:$0xff]
  %v48 = vld [vmem:[%s3 + $0x18] sm:$0xff]
  %v49 = vld [vmem:[%s3 + $0x20] sm:$0xff]
  %v50 = vld [vmem:[%s3 + $0x28] sm:$0xff]
  %v51 = vld [vmem:[%s4] sm:$0xff]
  %v52 = vld [vmem:[%s4 + $0x8] sm:$0xff]
  %v53 = vld [vmem:[%s4 + $0x10] sm:$0xff]
  %v54 = vld [vmem:[%s4 + $0x18] sm:$0xff]
  %v55 = vld [vmem:[%s4 + $0x20] sm:$0xff]
  %v56 = vld [vmem:[%s4 + $0x28] sm:$0xff]
  %v57 = vld [vmem:[%s0] sm:$0xff]
  %v58 = vld [vmem:[%s0 + $0x8] sm:$0xff]
  %v59 = vld [vmem:[%s0 + $0x10] sm:$0xff]
  %v60 = vld [vmem:[%s0 + $0x18] sm:$0xff]
  %v61 = vld [vmem:[%s0 + $0x20] sm:$0xff]
  %v62 = vld [vmem:[%s0 + $0x28] sm:$0xff]
  %v63 = vld [vmem:[%s0 + $0x30] sm:$0xff]
  %v64 = vld [vmem:[%s0 + $0x38] sm:$0xff]
  %v65 = vld [vmem:[%s0 + $0x40] sm:$0xff]
  %v66 = vld [vmem:[%s0 + $0x48] sm:$0xff]
  %v67 = vld [vmem:[%s0 + $0x50] sm:$0xff]
  %v68 = vld [vmem:[%s0 + $0x58] sm:$0xff]
  %v69 = vld [vmem:[%s0 + $0x60] sm:$0xff]
  %v70 = vld [vmem:[%s0 + $0x68] sm:$0xff]
  %v71 = vld [vmem:[%s0 + $0x70] sm:$0xff]
  %v72 = vld [vmem:[%s0 + $0x78] sm:$0xff]
  %v73 = vld [vmem:[%s0 + $0x80] sm:$0xff]
  %v74 = vld [vmem:[%s0 + $0x88] sm:$0xff]
  %76 = vset.pattern.permute.xlu0 0
  %77 = vperm.xlu0 %76, %v31
  %v78 = vpop.permute.xlu0 %77
  %81 = vset.pattern.permute.xlu0 0
  %82 = vperm.xlu0 %81, %v32
  %v83 = vpop.permute.xlu0 %82
  %86 = vset.pattern.permute.xlu0 0
  %87 = vperm.xlu0 %86, %v33
  %v88 = vpop.permute.xlu0 %87
  %91 = vset.pattern.permute.xlu0 0
  %92 = vperm.xlu0 %91, %v34
  %v93 = vpop.permute.xlu0 %92
  %vm95 = vcmask 130048
  %v97 = vsel %vm95, %v24, 0
  %v100 = vsel %vm95, %v26, 0
  %v103 = vsel %vm95, %v28, 0
  %v106 = vsel %vm95, %v30, 0
  %108 = vmatprep.subr.mxu0 0.0
  %109 = vmatpush1.msra.mxu0 %v72
  %110 = vmatprep.subr.mxu0 0.0
  %111 = vmatpush1.msra.mxu0 %v71
  %112 = vmatprep.subr.mxu0 0.0
  %113 = vmatpush1.msra.mxu0 %v70
  %114 = vmatprep.subr.mxu0 0.0
  %115 = vmatpush1.msra.mxu0 %v69
  %116 = vmatprep.subr.mxu0 0.0
  %117 = vmatpush1.msra.mxu0 %v68
  %118 = vmatprep.subr.mxu0 0.0
  %119 = vmatpush1.msra.mxu0 %v67
  %120 = vmatprep.subr.mxu0 0.0
  %121 = vmatpush1.msra.mxu0 %v66
  %122 = vmatprep.subr.mxu0 0.0
  %123 = vmatpush1.msra.mxu0 %v65
  %124 = vmatprep.subr.mxu0 0.0
  %125 = vmatpush1.msra.mxu0 %v64
  %126 = vmatprep.subr.mxu0 0.0
  %127 = vmatpush1.msra.mxu0 %v63
  %128 = vmatprep.subr.mxu0 0.0
  %129 = vmatpush1.msra.mxu0 %v62
  %130 = vmatprep.subr.mxu0 0.0
  %131 = vmatpush1.msra.mxu0 %v61
  %132 = vmatprep.subr.mxu0 0.0
  %133 = vmatpush1.msra.mxu0 %v60
  %134 = vmatprep.subr.mxu0 0.0
  %135 = vmatpush1.msra.mxu0 %v59
  %136 = vmatprep.subr.mxu0 0.0
  %137 = vmatpush1.msra.mxu0 %v58
  %138 = vmatprep.subr.mxu0 0.0
  %139 = vmatpush1.msra.mxu0 %v57
  %140 = vmatprep.subr.mxu0 0.0
  %141 = vmatpush2.msra.mxu0 0.0
  %142 = vmatprep.subr.mxu0 0.0
  %143 = vmatpush2.msra.mxu0 0.0
  %144 = vmatprep.subr.mxu0 0.0
  %145 = vmatpush2.msra.mxu0 0.0
  %146 = vmatprep.subr.mxu0 0.0
  %147 = vmatpush2.msra.mxu0 0.0
  %148 = vmatprep.subr.mxu0 0.0
  %149 = vmatpush2.msra.mxu0 0.0
  %150 = vmatprep.subr.mxu0 0.0
  %151 = vmatpush2.msra.mxu0 0.0
  %152 = vmatprep.subr.mxu0 0.0
  %153 = vmatpush2.msra.mxu0 0.0
  %154 = vmatprep.subr.mxu0 0.0
  %155 = vmatpush2.msra.mxu0 0.0
  %156 = vmatprep.subr.mxu0 0.0
  %157 = vmatpush2.msra.mxu0 0.0
  %158 = vmatprep.subr.mxu0 0.0
  %159 = vmatpush2.msra.mxu0 0.0
  %160 = vmatprep.subr.mxu0 0.0
  %161 = vmatpush2.msra.mxu0 0.0
  %162 = vmatprep.subr.mxu0 0.0
  %163 = vmatpush2.msra.mxu0 0.0
  %164 = vmatprep.subr.mxu0 0.0
  %165 = vmatpush2.msra.mxu0 0.0
  %166 = vmatprep.subr.mxu0 0.0
  %167 = vmatpush2.msra.mxu0 0.0
  %168 = vmatprep.subr.mxu0 0.0
  %169 = vmatpush2.msra.mxu0 %v74
  %170 = vmatprep.subr.mxu0 0.0
  %171 = vmatpush2.msra.mxu0 %v73
  %172 = vmatprep.mubr.f32.mxu0 %v97
  %173 = vmatmul.mubr.f32.gmra.mxu0 %v23
  %v174 = vpop.f32.mrf.mxu0
  %v175 = vadd.f32 %v78, %v174
  %v176 = vpop.f32.mrf.mxu0
  %177 = vmatprep.mubr.f32.mxu0 %v100
  %178 = vmatmul.mubr.f32.gmra.mxu0 %v25
  %v179 = vpop.f32.mrf.mxu0
  %v180 = vadd.f32 %v83, %v179
  %v181 = vpop.f32.mrf.mxu0
  %182 = vmatprep.mubr.f32.mxu0 %v103
  %183 = vmatmul.mubr.f32.gmra.mxu0 %v27
  %v184 = vpop.f32.mrf.mxu0
  %v185 = vadd.f32 %v88, %v184
  %v186 = vpop.f32.mrf.mxu0
  %187 = vmatprep.mubr.f32.mxu0 %v106
  %188 = vmatmul.mubr.f32.gmra.mxu0 %v29
  %v189 = vpop.f32.mrf.mxu0
  %v190 = vadd.f32 %v93, %v189
  %v191 = vpop.f32.mrf.mxu0
  %192 = vdwg.mxu0
  %v193 = vsel %vm95, %v175, 0.0
  %194 = vadd.xlane.f32.xlu0 %v193
  %v195 = vpop.xlane.xlu0 %194
  %v196 = vsel %vm95, %v180, 0.0
  %197 = vadd.xlane.f32.xlu0 %v196
  %v198 = vpop.xlane.xlu0 %197
  %v199 = vsel %vm95, %v185, 0.0
  %200 = vadd.xlane.f32.xlu0 %v199
  %v201 = vpop.xlane.xlu0 %200
  %v202 = vsel %vm95, %v190, 0.0
  %203 = vadd.xlane.f32.xlu0 %v202
  %v204 = vpop.xlane.xlu0 %203
  %v205 = vadd.f32 %v195, 0.0
  %v206 = vadd.f32 %v198, 0.0
  %v207 = vadd.f32 %v201, 0.0
  %v208 = vadd.f32 %v204, 0.0
  %s209 = scalar_lea.vmem %s0, 144
  %v210 = vld [vmem:[%s209] sm:$0xff]
  %v211 = vld [vmem:[%s209 + $0x8] sm:$0xff]
  %v212 = vld [vmem:[%s209 + $0x10] sm:$0xff]
  %v213 = vld [vmem:[%s209 + $0x18] sm:$0xff]
  %v214 = vld [vmem:[%s209 + $0x20] sm:$0xff]
  %v215 = vld [vmem:[%s209 + $0x28] sm:$0xff]
  %v216 = vld [vmem:[%s209 + $0x30] sm:$0xff]
  %v217 = vld [vmem:[%s209 + $0x38] sm:$0xff]
  %v218 = vld [vmem:[%s209 + $0x40] sm:$0xff]
  %v219 = vld [vmem:[%s209 + $0x48] sm:$0xff]
  %v220 = vld [vmem:[%s209 + $0x50] sm:$0xff]
  %v221 = vld [vmem:[%s209 + $0x58] sm:$0xff]
  %v222 = vld [vmem:[%s209 + $0x60] sm:$0xff]
  %v223 = vld [vmem:[%s209 + $0x68] sm:$0xff]
  %v224 = vld [vmem:[%s209 + $0x70] sm:$0xff]
  %v225 = vld [vmem:[%s209 + $0x78] sm:$0xff]
  %v226 = vld [vmem:[%s209 + $0x80] sm:$0xff]
  %v227 = vld [vmem:[%s209 + $0x88] sm:$0xff]
  %228 = vmatprep.subr.mxu0 0.0
  %229 = vmatpush1.msra.mxu0 %v225
  %230 = vmatprep.subr.mxu0 0.0
  %231 = vmatpush1.msra.mxu0 %v224
  %232 = vmatprep.subr.mxu0 0.0
  %233 = vmatpush1.msra.mxu0 %v223
  %234 = vmatprep.subr.mxu0 0.0
  %235 = vmatpush1.msra.mxu0 %v222
  %236 = vmatprep.subr.mxu0 0.0
  %237 = vmatpush1.msra.mxu0 %v221
  %238 = vmatprep.subr.mxu0 0.0
  %239 = vmatpush1.msra.mxu0 %v220
  %240 = vmatprep.subr.mxu0 0.0
  %241 = vmatpush1.msra.mxu0 %v219
  %242 = vmatprep.subr.mxu0 0.0
  %243 = vmatpush1.msra.mxu0 %v218
  %244 = vmatprep.subr.mxu0 0.0
  %245 = vmatpush1.msra.mxu0 %v217
  %246 = vmatprep.subr.mxu0 0.0
  %247 = vmatpush1.msra.mxu0 %v216
  %248 = vmatprep.subr.mxu0 0.0
  %249 = vmatpush1.msra.mxu0 %v215
  %250 = vmatprep.subr.mxu0 0.0
  %251 = vmatpush1.msra.mxu0 %v214
  %252 = vmatprep.subr.mxu0 0.0
  %253 = vmatpush1.msra.mxu0 %v213
  %254 = vmatprep.subr.mxu0 0.0
  %255 = vmatpush1.msra.mxu0 %v212
  %256 = vmatprep.subr.mxu0 0.0
  %257 = vmatpush1.msra.mxu0 %v211
  %258 = vmatprep.subr.mxu0 0.0
  %259 = vmatpush1.msra.mxu0 %v210
  %260 = vmatprep.subr.mxu0 0.0
  %261 = vmatpush2.msra.mxu0 0.0
  %262 = vmatprep.subr.mxu0 0.0
  %263 = vmatpush2.msra.mxu0 0.0
  %264 = vmatprep.subr.mxu0 0.0
  %265 = vmatpush2.msra.mxu0 0.0
  %266 = vmatprep.subr.mxu0 0.0
  %267 = vmatpush2.msra.mxu0 0.0
  %268 = vmatprep.subr.mxu0 0.0
  %269 = vmatpush2.msra.mxu0 0.0
  %270 = vmatprep.subr.mxu0 0.0
  %271 = vmatpush2.msra.mxu0 0.0
  %272 = vmatprep.subr.mxu0 0.0
  %273 = vmatpush2.msra.mxu0 0.0
  %274 = vmatprep.subr.mxu0 0.0
  %275 = vmatpush2.msra.mxu0 0.0
  %276 = vmatprep.subr.mxu0 0.0
  %277 = vmatpush2.msra.mxu0 0.0
  %278 = vmatprep.subr.mxu0 0.0
  %279 = vmatpush2.msra.mxu0 0.0
  %280 = vmatprep.subr.mxu0 0.0
  %281 = vmatpush2.msra.mxu0 0.0
  %282 = vmatprep.subr.mxu0 0.0
  %283 = vmatpush2.msra.mxu0 0.0
  %284 = vmatprep.subr.mxu0 0.0
  %285 = vmatpush2.msra.mxu0 0.0
  %286 = vmatprep.subr.mxu0 0.0
  %287 = vmatpush2.msra.mxu0 0.0
  %288 = vmatprep.subr.mxu0 0.0
  %289 = vmatpush2.msra.mxu0 %v227
  %290 = vmatprep.subr.mxu0 0.0
  %291 = vmatpush2.msra.mxu0 %v226
  %292 = vmatprep.mubr.f32.mxu0 %v97
  %293 = vmatmul.mubr.f32.gmra.mxu0 %v23
  %v294 = vpop.f32.mrf.mxu0
  %v295 = vadd.f32 %v78, %v294
  %v296 = vpop.f32.mrf.mxu0
  %297 = vmatprep.mubr.f32.mxu0 %v100
  %298 = vmatmul.mubr.f32.gmra.mxu0 %v25
  %v299 = vpop.f32.mrf.mxu0
  %v300 = vadd.f32 %v83, %v299
  %v301 = vpop.f32.mrf.mxu0
  %302 = vmatprep.mubr.f32.mxu0 %v103
  %303 = vmatmul.mubr.f32.gmra.mxu0 %v27
  %v304 = vpop.f32.mrf.mxu0
  %v305 = vadd.f32 %v88, %v304
  %v306 = vpop.f32.mrf.mxu0
  %307 = vmatprep.mubr.f32.mxu0 %v106
  %308 = vmatmul.mubr.f32.gmra.mxu0 %v29
  %v309 = vpop.f32.mrf.mxu0
  %v310 = vadd.f32 %v93, %v309
  %v311 = vpop.f32.mrf.mxu0
  %312 = vdwg.mxu0
  %v313 = vsel %vm95, %v295, 0.0
  %314 = vadd.xlane.f32.xlu0 %v313
  %v315 = vpop.xlane.xlu0 %314
  %v316 = vsel %vm95, %v300, 0.0
  %317 = vadd.xlane.f32.xlu0 %v316
  %v318 = vpop.xlane.xlu0 %317
  %v319 = vsel %vm95, %v305, 0.0
  %320 = vadd.xlane.f32.xlu0 %v319
  %v321 = vpop.xlane.xlu0 %320
  %v322 = vsel %vm95, %v310, 0.0
  %323 = vadd.xlane.f32.xlu0 %v322
  %v324 = vpop.xlane.xlu0 %323
  %v325 = vadd.f32 %v205, %v315
  %v326 = vadd.f32 %v206, %v318
  %v327 = vadd.f32 %v207, %v321
  %v328 = vadd.f32 %v208, %v324
  %v329 = vmul.f32 %v325, 0.03125
  %v330 = vmul.f32 %v326, 0.03125
  %v331 = vmul.f32 %v327, 0.03125
  %v332 = vmul.f32 %v328, 0.03125
  %v333 = vsub.f32 %v175, %v329
  %v334 = vsub.f32 %v180, %v330
  %v335 = vsub.f32 %v185, %v331
  %v336 = vsub.f32 %v190, %v332
  %v337 = vmul.f32 %v333, %v333
  %v338 = vmul.f32 %v334, %v334
  %v339 = vmul.f32 %v335, %v335
  %v340 = vmul.f32 %v336, %v336
  %v341 = vsel %vm95, %v337, 0.0
  %342 = vadd.xlane.f32.xlu0 %v341
  %v343 = vpop.xlane.xlu0 %342
  %v344 = vsel %vm95, %v338, 0.0
  %345 = vadd.xlane.f32.xlu0 %v344
  %v346 = vpop.xlane.xlu0 %345
  %v347 = vsel %vm95, %v339, 0.0
  %348 = vadd.xlane.f32.xlu0 %v347
  %v349 = vpop.xlane.xlu0 %348
  %v350 = vsel %vm95, %v340, 0.0
  %351 = vadd.xlane.f32.xlu0 %v350
  %v352 = vpop.xlane.xlu0 %351
  %v353 = vadd.f32 %v343, 0.0
  %v354 = vadd.f32 %v346, 0.0
  %v355 = vadd.f32 %v349, 0.0
  %v356 = vadd.f32 %v352, 0.0
  %v357 = vsub.f32 %v295, %v329
  %v358 = vsub.f32 %v300, %v330
  %v359 = vsub.f32 %v305, %v331
  %v360 = vsub.f32 %v310, %v332
  %v361 = vmul.f32 %v357, %v357
  %v362 = vmul.f32 %v358, %v358
  %v363 = vmul.f32 %v359, %v359
  %v364 = vmul.f32 %v360, %v360
  %v365 = vsel %vm95, %v361, 0.0
  %366 = vadd.xlane.f32.xlu0 %v365
  %v367 = vpop.xlane.xlu0 %366
  %v368 = vsel %vm95, %v362, 0.0
  %369 = vadd.xlane.f32.xlu0 %v368
  %v370 = vpop.xlane.xlu0 %369
  %v371 = vsel %vm95, %v363, 0.0
  %372 = vadd.xlane.f32.xlu0 %v371
  %v373 = vpop.xlane.xlu0 %372
  %v374 = vsel %vm95, %v364, 0.0
  %375 = vadd.xlane.f32.xlu0 %v374
  %v376 = vpop.xlane.xlu0 %375
  %v377 = vadd.f32 %v353, %v367
  %v378 = vadd.f32 %v354, %v370
  %v379 = vadd.f32 %v355, %v373
  %v380 = vadd.f32 %v356, %v376
  %v381 = vmul.f32 %v377, 0.03125
  %v382 = vmul.f32 %v378, 0.03125
  %v383 = vmul.f32 %v379, 0.03125
  %v384 = vmul.f32 %v380, 0.03125
  %v385 = vadd.f32 %v381, 1e-05
  %v386 = vadd.f32 %v382, 1e-05
  %v387 = vadd.f32 %v383, 1e-05
  %v388 = vadd.f32 %v384, 1e-05
  %v389 = vrsqrt.pop %v385
  %v390 = vrsqrt.pop %v386
  %v391 = vrsqrt.pop %v387
  %v392 = vrsqrt.pop %v388
  %v393 = vmul.f32 %v36, %v389
  %v394 = vmul.f32 %v37, %v390
  %v395 = vmul.f32 %v38, %v391
  %v396 = vmul.f32 %v39, %v392
  %v397 = vmul.f32 %v329, %v393
  %v398 = vmul.f32 %v330, %v394
  %v399 = vmul.f32 %v331, %v395
  %v400 = vmul.f32 %v332, %v396
  %v401 = vsub.f32 %v41, %v397
  %v402 = vsub.f32 %v42, %v398
  %v403 = vsub.f32 %v43, %v399
  %v404 = vsub.f32 %v44, %v400
  %406 = vset.pattern.permute.xlu0 0
  %407 = vperm.xlu0 %406, %v393
  %v408 = vpop.permute.xlu0 %407
  %411 = vset.pattern.permute.xlu0 0
  %412 = vperm.xlu0 %411, %v394
  %v413 = vpop.permute.xlu0 %412
  %416 = vset.pattern.permute.xlu0 0
  %417 = vperm.xlu0 %416, %v395
  %v418 = vpop.permute.xlu0 %417
  %421 = vset.pattern.permute.xlu0 0
  %422 = vperm.xlu0 %421, %v396
  %v423 = vpop.permute.xlu0 %422
  %v425 = vmul.f32 %v175, %v408
  %v426 = vmul.f32 %v180, %v413
  %v427 = vmul.f32 %v185, %v418
  %v428 = vmul.f32 %v190, %v423
  %430 = vset.pattern.permute.xlu0 0
  %431 = vperm.xlu0 %430, %v401
  %v432 = vpop.permute.xlu0 %431
  %435 = vset.pattern.permute.xlu0 0
  %436 = vperm.xlu0 %435, %v402
  %v437 = vpop.permute.xlu0 %436
  %440 = vset.pattern.permute.xlu0 0
  %441 = vperm.xlu0 %440, %v403
  %v442 = vpop.permute.xlu0 %441
  %445 = vset.pattern.permute.xlu0 0
  %446 = vperm.xlu0 %445, %v404
  %v447 = vpop.permute.xlu0 %446
  %v449 = vadd.f32 %v425, %v432
  %v450 = vadd.f32 %v426, %v437
  %v451 = vadd.f32 %v427, %v442
  %v452 = vadd.f32 %v428, %v447
  %v453 = vmax.f32 %v449, 0.0
  %v454 = vmax.f32 %v450, 0.0
  %v455 = vmax.f32 %v451, 0.0
  %v456 = vmax.f32 %v452, 0.0
  %458 = vset.pattern.permute.xlu0 0
  %459 = vperm.xlu0 %458, %v51
  %v460 = vpop.permute.xlu0 %459
  %463 = vset.pattern.permute.xlu0 0
  %464 = vperm.xlu0 %463, %v52
  %v465 = vpop.permute.xlu0 %464
  %468 = vset.pattern.permute.xlu0 0
  %469 = vperm.xlu0 %468, %v53
  %v470 = vpop.permute.xlu0 %469
  %473 = vset.pattern.permute.xlu0 0
  %474 = vperm.xlu0 %473, %v54
  %v475 = vpop.permute.xlu0 %474
  %478 = vset.pattern.permute.xlu0 0
  %479 = vperm.xlu0 %478, %v55
  %v480 = vpop.permute.xlu0 %479
  %483 = vset.pattern.permute.xlu0 0
  %484 = vperm.xlu0 %483, %v56
  %v485 = vpop.permute.xlu0 %484
  %vm487 = vcmask 261120
  %v489 = vsel %vm487, %v45, 0
  %v492 = vsel %vm487, %v46, 0
  %v495 = vsel %vm487, %v47, 0
  %v498 = vsel %vm487, %v48, 0
  %v501 = vsel %vm487, %v49, 0
  %v504 = vsel %vm487, %v50, 0
  %506 = vmatprep.subr.mxu0 0.0
  %507 = vmatpush1.msra.mxu0 0.0
  %508 = vmatprep.subr.mxu0 0.0
  %509 = vmatpush1.msra.mxu0 0.0
  %510 = vmatprep.subr.mxu0 0.0
  %511 = vmatpush1.msra.mxu0 0.0
  %512 = vmatprep.subr.mxu0 0.0
  %513 = vmatpush1.msra.mxu0 0.0
  %514 = vmatprep.subr.mxu0 0.0
  %515 = vmatpush1.msra.mxu0 0.0
  %516 = vmatprep.subr.mxu0 0.0
  %517 = vmatpush1.msra.mxu0 0.0
  %518 = vmatprep.subr.mxu0 0.0
  %519 = vmatpush1.msra.mxu0 0.0
  %520 = vmatprep.subr.mxu0 0.0
  %521 = vmatpush1.msra.mxu0 0.0
  %522 = vmatprep.subr.mxu0 0.0
  %523 = vmatpush1.msra.mxu0 0.0
  %524 = vmatprep.subr.mxu0 0.0
  %525 = vmatpush1.msra.mxu0 0.0
  %526 = vmatprep.subr.mxu0 0.0
  %527 = vmatpush1.msra.mxu0 0.0
  %528 = vmatprep.subr.mxu0 0.0
  %529 = vmatpush1.msra.mxu0 0.0
  %530 = vmatprep.subr.mxu0 0.0
  %531 = vmatpush1.msra.mxu0 %v456
  %532 = vmatprep.subr.mxu0 0.0
  %533 = vmatpush1.msra.mxu0 %v455
  %534 = vmatprep.subr.mxu0 0.0
  %535 = vmatpush1.msra.mxu0 %v454
  %536 = vmatprep.subr.mxu0 0.0
  %537 = vmatpush1.msra.mxu0 %v453
  %538 = vmatprep.subr.mxu0 0.0
  %539 = vmatpush2.msra.mxu0 0.0
  %540 = vmatprep.subr.mxu0 0.0
  %541 = vmatpush2.msra.mxu0 0.0
  %542 = vmatprep.subr.mxu0 0.0
  %543 = vmatpush2.msra.mxu0 0.0
  %544 = vmatprep.subr.mxu0 0.0
  %545 = vmatpush2.msra.mxu0 0.0
  %546 = vmatprep.subr.mxu0 0.0
  %547 = vmatpush2.msra.mxu0 0.0
  %548 = vmatprep.subr.mxu0 0.0
  %549 = vmatpush2.msra.mxu0 0.0
  %550 = vmatprep.subr.mxu0 0.0
  %551 = vmatpush2.msra.mxu0 0.0
  %552 = vmatprep.subr.mxu0 0.0
  %553 = vmatpush2.msra.mxu0 0.0
  %554 = vmatprep.subr.mxu0 0.0
  %555 = vmatpush2.msra.mxu0 0.0
  %556 = vmatprep.subr.mxu0 0.0
  %557 = vmatpush2.msra.mxu0 0.0
  %558 = vmatprep.subr.mxu0 0.0
  %559 = vmatpush2.msra.mxu0 0.0
  %560 = vmatprep.subr.mxu0 0.0
  %561 = vmatpush2.msra.mxu0 0.0
  %562 = vmatprep.subr.mxu0 0.0
  %563 = vmatpush2.msra.mxu0 0.0
  %564 = vmatprep.subr.mxu0 0.0
  %565 = vmatpush2.msra.mxu0 0.0
  %566 = vmatprep.subr.mxu0 0.0
  %567 = vmatpush2.msra.mxu0 0.0
  %568 = vmatprep.subr.mxu0 0.0
  %569 = vmatpush2.msra.mxu0 0.0
  %570 = vmatprep.mubr.f32.mxu0 0.0
  %571 = vmatmul.mubr.f32.gmra.mxu0 %v489
  %v572 = vpop.f32.mrf.mxu0
  %v573 = vadd.f32 %v460, %v572
  %v574 = vpop.f32.mrf.mxu0
  %575 = vmatprep.mubr.f32.mxu0 0.0
  %576 = vmatmul.mubr.f32.gmra.mxu0 %v492
  %v577 = vpop.f32.mrf.mxu0
  %v578 = vadd.f32 %v465, %v577
  %v579 = vpop.f32.mrf.mxu0
  %580 = vmatprep.mubr.f32.mxu0 0.0
  %581 = vmatmul.mubr.f32.gmra.mxu0 %v495
  %v582 = vpop.f32.mrf.mxu0
  %v583 = vadd.f32 %v470, %v582
  %v584 = vpop.f32.mrf.mxu0
  %585 = vmatprep.mubr.f32.mxu0 0.0
  %586 = vmatmul.mubr.f32.gmra.mxu0 %v498
  %v587 = vpop.f32.mrf.mxu0
  %v588 = vadd.f32 %v475, %v587
  %v589 = vpop.f32.mrf.mxu0
  %590 = vmatprep.mubr.f32.mxu0 0.0
  %591 = vmatmul.mubr.f32.gmra.mxu0 %v501
  %v592 = vpop.f32.mrf.mxu0
  %v593 = vadd.f32 %v480, %v592
  %v594 = vpop.f32.mrf.mxu0
  %595 = vmatprep.mubr.f32.mxu0 0.0
  %596 = vmatmul.mubr.f32.gmra.mxu0 %v504
  %v597 = vpop.f32.mrf.mxu0
  %v598 = vadd.f32 %v485, %v597
  %v599 = vpop.f32.mrf.mxu0
  %600 = vdwg.mxu0
  %601 = vst.msk [vmem:[%s5] sm:$0xff] %vm95, %v573
  %602 = vst.msk [vmem:[%s5 + $0x8] sm:$0xff] %vm95, %v578
  %603 = vst.msk [vmem:[%s5 + $0x10] sm:$0xff] %vm95, %v583
  %604 = vst.msk [vmem:[%s5 + $0x18] sm:$0xff] %vm95, %v588
  %605 = vst.msk [vmem:[%s6] sm:$0xff] %vm95, %v593
  %606 = vst.msk [vmem:[%s7] sm:$0xff] %vm95, %v598
  %v607 = vmul.f32 %v295, %v408
  %v608 = vmul.f32 %v300, %v413
  %v609 = vmul.f32 %v305, %v418
  %v610 = vmul.f32 %v310, %v423
  %v611 = vadd.f32 %v607, %v432
  %v612 = vadd.f32 %v608, %v437
  %v613 = vadd.f32 %v609, %v442
  %v614 = vadd.f32 %v610, %v447
  %v615 = vmax.f32 %v611, 0.0
  %v616 = vmax.f32 %v612, 0.0
  %v617 = vmax.f32 %v613, 0.0
  %v618 = vmax.f32 %v614, 0.0
  %619 = vmatprep.subr.mxu0 0.0
  %620 = vmatpush1.msra.mxu0 0.0
  %621 = vmatprep.subr.mxu0 0.0
  %622 = vmatpush1.msra.mxu0 0.0
  %623 = vmatprep.subr.mxu0 0.0
  %624 = vmatpush1.msra.mxu0 0.0
  %625 = vmatprep.subr.mxu0 0.0
  %626 = vmatpush1.msra.mxu0 0.0
  %627 = vmatprep.subr.mxu0 0.0
  %628 = vmatpush1.msra.mxu0 0.0
  %629 = vmatprep.subr.mxu0 0.0
  %630 = vmatpush1.msra.mxu0 0.0
  %631 = vmatprep.subr.mxu0 0.0
  %632 = vmatpush1.msra.mxu0 0.0
  %633 = vmatprep.subr.mxu0 0.0
  %634 = vmatpush1.msra.mxu0 0.0
  %635 = vmatprep.subr.mxu0 0.0
  %636 = vmatpush1.msra.mxu0 0.0
  %637 = vmatprep.subr.mxu0 0.0
  %638 = vmatpush1.msra.mxu0 0.0
  %639 = vmatprep.subr.mxu0 0.0
  %640 = vmatpush1.msra.mxu0 0.0
  %641 = vmatprep.subr.mxu0 0.0
  %642 = vmatpush1.msra.mxu0 0.0
  %643 = vmatprep.subr.mxu0 0.0
  %644 = vmatpush1.msra.mxu0 %v618
  %645 = vmatprep.subr.mxu0 0.0
  %646 = vmatpush1.msra.mxu0 %v617
  %647 = vmatprep.subr.mxu0 0.0
  %648 = vmatpush1.msra.mxu0 %v616
  %649 = vmatprep.subr.mxu0 0.0
  %650 = vmatpush1.msra.mxu0 %v615
  %651 = vmatprep.subr.mxu0 0.0
  %652 = vmatpush2.msra.mxu0 0.0
  %653 = vmatprep.subr.mxu0 0.0
  %654 = vmatpush2.msra.mxu0 0.0
  %655 = vmatprep.subr.mxu0 0.0
  %656 = vmatpush2.msra.mxu0 0.0
  %657 = vmatprep.subr.mxu0 0.0
  %658 = vmatpush2.msra.mxu0 0.0
  %659 = vmatprep.subr.mxu0 0.0
  %660 = vmatpush2.msra.mxu0 0.0
  %661 = vmatprep.subr.mxu0 0.0
  %662 = vmatpush2.msra.mxu0 0.0
  %663 = vmatprep.subr.mxu0 0.0
  %664 = vmatpush2.msra.mxu0 0.0
  %665 = vmatprep.subr.mxu0 0.0
  %666 = vmatpush2.msra.mxu0 0.0
  %667 = vmatprep.subr.mxu0 0.0
  %668 = vmatpush2.msra.mxu0 0.0
  %669 = vmatprep.subr.mxu0 0.0
  %670 = vmatpush2.msra.mxu0 0.0
  %671 = vmatprep.subr.mxu0 0.0
  %672 = vmatpush2.msra.mxu0 0.0
  %673 = vmatprep.subr.mxu0 0.0
  %674 = vmatpush2.msra.mxu0 0.0
  %675 = vmatprep.subr.mxu0 0.0
  %676 = vmatpush2.msra.mxu0 0.0
  %677 = vmatprep.subr.mxu0 0.0
  %678 = vmatpush2.msra.mxu0 0.0
  %679 = vmatprep.subr.mxu0 0.0
  %680 = vmatpush2.msra.mxu0 0.0
  %681 = vmatprep.subr.mxu0 0.0
  %682 = vmatpush2.msra.mxu0 0.0
  %683 = vmatprep.mubr.f32.mxu0 0.0
  %684 = vmatmul.mubr.f32.gmra.mxu0 %v489
  %v685 = vpop.f32.mrf.mxu0
  %v686 = vadd.f32 %v460, %v685
  %v687 = vpop.f32.mrf.mxu0
  %688 = vmatprep.mubr.f32.mxu0 0.0
  %689 = vmatmul.mubr.f32.gmra.mxu0 %v492
  %v690 = vpop.f32.mrf.mxu0
  %v691 = vadd.f32 %v465, %v690
  %v692 = vpop.f32.mrf.mxu0
  %693 = vmatprep.mubr.f32.mxu0 0.0
  %694 = vmatmul.mubr.f32.gmra.mxu0 %v495
  %v695 = vpop.f32.mrf.mxu0
  %v696 = vadd.f32 %v470, %v695
  %v697 = vpop.f32.mrf.mxu0
  %698 = vmatprep.mubr.f32.mxu0 0.0
  %699 = vmatmul.mubr.f32.gmra.mxu0 %v498
  %v700 = vpop.f32.mrf.mxu0
  %v701 = vadd.f32 %v475, %v700
  %v702 = vpop.f32.mrf.mxu0
  %703 = vmatprep.mubr.f32.mxu0 0.0
  %704 = vmatmul.mubr.f32.gmra.mxu0 %v501
  %v705 = vpop.f32.mrf.mxu0
  %v706 = vadd.f32 %v480, %v705
  %v707 = vpop.f32.mrf.mxu0
  %708 = vmatprep.mubr.f32.mxu0 0.0
  %709 = vmatmul.mubr.f32.gmra.mxu0 %v504
  %v710 = vpop.f32.mrf.mxu0
  %v711 = vadd.f32 %v485, %v710
  %v712 = vpop.f32.mrf.mxu0
  %713 = vdwg.mxu0
  %s714 = scalar_lea.vmem %s5, 32
  %715 = vst.msk [vmem:[%s714] sm:$0xff] %vm95, %v686
  %716 = vst.msk [vmem:[%s714 + $0x8] sm:$0xff] %vm95, %v691
  %717 = vst.msk [vmem:[%s714 + $0x10] sm:$0xff] %vm95, %v696
  %718 = vst.msk [vmem:[%s714 + $0x18] sm:$0xff] %vm95, %v701
  %s719 = scalar_lea.vmem %s6, 8
  %720 = vst.msk [vmem:[%s719] sm:$0xff] %vm95, %v706
  %s721 = scalar_lea.vmem %s7, 8
  %722 = vst.msk [vmem:[%s721] sm:$0xff] %vm95, %v711
  // Predicated region
  $region22: #{_lambda_.4} parent=0 // pred_check
    _
  $region23: #{_lambda_.4} parent=0 // pred_check_branch
    %724 = sbr.rel (0) target = $region25
  $region24: #{_lambda_.4} parent=0 // pred_region
    _
  $region25: #{_lambda_.4} parent=0 // pred_fallthru
    _
  // Predicated region
  $region26: #{_lambda_.4} parent=0 // pred_check
    _
  $region27: #{_lambda_.4} parent=0 // pred_check_branch
    %726 = sbr.rel (0) target = $region29
  $region28: #{_lambda_.4} parent=0 // pred_region
    _
  $region29: #{_lambda_.4} parent=0 // pred_fallthru
    _
  // Predicated region
  $region30: #{_lambda_.4} parent=0 // pred_check
    _
  $region31: #{_lambda_.4} parent=0 // pred_check_branch
    %728 = sbr.rel (0) target = $region33
  $region32: #{_lambda_.4} parent=0 // pred_region
    _
  $region33: #{_lambda_.4} parent=0 // pred_fallthru
    _
  // Predicated region
  $region34: #{_lambda_.4} parent=0 // pred_check
    _
  $region35: #{_lambda_.4} parent=0 // pred_check_branch
    %730 = sbr.rel (0) target = $region37
  $region36: #{_lambda_.4} parent=0 // pred_region
    _
  $region37: #{_lambda_.4} parent=0 // pred_fallthru
    _
  // Predicated region
  $region38: #{_lambda_.4} parent=0 // pred_check
    _
  $region39: #{_lambda_.4} parent=0 // pred_check_branch
    %732 = sbr.rel (0) target = $region41
  $region40: #{_lambda_.4} parent=0 // pred_region
    _
  $region41: #{_lambda_.4} parent=0 // pred_fallthru
    _
  // Predicated region
  $region42: #{_lambda_.4} parent=0 // pred_check
    _
  $region43: #{_lambda_.4} parent=0 // pred_check_branch
    %734 = sbr.rel (0) target = $region45
  $region44: #{_lambda_.4} parent=0 // pred_region
    _
  $region45: #{_lambda_.4} parent=0 // pred_fallthru
    _

// kernel: _lambda_.5
$region0: #{_lambda_.5}
  #allocation0 [shape = 'u32[]', space=smem, size = 0x4, offset = 0x4, fixed_abs, tag = 'smem constant byte address 0x4 - core index']
  #allocation1 [shape = 'u32[144,128]{1,0:T(1,128)}', space=vmem, size = 0x12000, scoped, tag = 'internal scratch']
  %s0 = inlined_call_operand.vmem [shape: f32[32,8], index: 0, kind: input, shape index: {}]
  %s1 = inlined_call_operand.vmem [shape: f32[32,8], index: 1, kind: input, shape index: {}]
  %s2 = inlined_call_operand.vmem [shape: f32[64,16], index: 2, kind: input, shape index: {}]
  %s3 = inlined_call_operand.vmem [shape: f32[2,64,32], index: 3, kind: output, shape index: {}]
  %s4 = sld [smem:[#allocation0]]
  $region22: #{_lambda_.5} parent=0
    _
  %s6 = ssub.s32 1, %s4
  %s7 = scalar_select 0, %s6, %s4
  // Predicated region
  $region2: #{_lambda_.5} parent=0 // pred_check
    _
  $region3: #{_lambda_.5} parent=0 // pred_check_branch
    %9 = sbr.rel (0) target = $region5
  $region4: #{_lambda_.5} parent=0 // pred_region
    _
  $region5: #{_lambda_.5} parent=0 // pred_fallthru
    _
  // Predicated region
  $region6: #{_lambda_.5} parent=0 // pred_check
    _
  $region7: #{_lambda_.5} parent=0 // pred_check_branch
    %11 = sbr.rel (0) target = $region9
  $region8: #{_lambda_.5} parent=0 // pred_region
    _
  $region9: #{_lambda_.5} parent=0 // pred_fallthru
    _
  // Predicated region
  $region10: #{_lambda_.5} parent=0 // pred_check
    _
  $region11: #{_lambda_.5} parent=0 // pred_check_branch
    %13 = sbr.rel (0) target = $region13
  $region12: #{_lambda_.5} parent=0 // pred_region
    _
  $region13: #{_lambda_.5} parent=0 // pred_fallthru
    _
  %v14 = vld [vmem:[%s0] sm:$0xff]
  %v15 = vld [vmem:[%s0 + $0x8] sm:$0xff]
  %v16 = vld [vmem:[%s0 + $0x10] sm:$0xff]
  %v17 = vld [vmem:[%s0 + $0x18] sm:$0xff]
  %v18 = vld [vmem:[%s1] sm:$0xff]
  %v19 = vld [vmem:[%s1 + $0x8] sm:$0xff]
  %v20 = vld [vmem:[%s1 + $0x10] sm:$0xff]
  %v21 = vld [vmem:[%s1 + $0x18] sm:$0xff]
  %vm22 = vcmask 64512
  %v24 = vsel %vm22, %v14, 0
  %v27 = vsel %vm22, %v15, 0
  %v30 = vsel %vm22, %v16, 0
  %v33 = vsel %vm22, %v17, 0
  %v36 = vsel %vm22, %v18, 0
  %v39 = vsel %vm22, %v19, 0
  %v42 = vsel %vm22, %v20, 0
  %v45 = vsel %vm22, %v21, 0
  %47 = vmatprep.subr.mxu0 0.0
  %48 = vmatpush1.xpose.msra.mxu0 0.0
  %49 = vmatprep.subr.mxu0 0.0
  %50 = vmatpush1.xpose.msra.mxu0 0.0
  %51 = vmatprep.subr.mxu0 0.0
  %52 = vmatpush1.xpose.msra.mxu0 0.0
  %53 = vmatprep.subr.mxu0 0.0
  %54 = vmatpush1.xpose.msra.mxu0 0.0
  %55 = vmatprep.subr.mxu0 0.0
  %56 = vmatpush1.xpose.msra.mxu0 0.0
  %57 = vmatprep.subr.mxu0 0.0
  %58 = vmatpush1.xpose.msra.mxu0 0.0
  %59 = vmatprep.subr.mxu0 0.0
  %60 = vmatpush1.xpose.msra.mxu0 0.0
  %61 = vmatprep.subr.mxu0 0.0
  %62 = vmatpush1.xpose.msra.mxu0 0.0
  %63 = vmatprep.subr.mxu0 0.0
  %64 = vmatpush1.xpose.msra.mxu0 0.0
  %65 = vmatprep.subr.mxu0 0.0
  %66 = vmatpush1.xpose.msra.mxu0 0.0
  %67 = vmatprep.subr.mxu0 0.0
  %68 = vmatpush1.xpose.msra.mxu0 0.0
  %69 = vmatprep.subr.mxu0 0.0
  %70 = vmatpush1.xpose.msra.mxu0 0.0
  %71 = vmatprep.subr.mxu0 0.0
  %72 = vmatpush1.xpose.msra.mxu0 %v45
  %73 = vmatprep.subr.mxu0 0.0
  %74 = vmatpush1.xpose.msra.mxu0 %v42
  %75 = vmatprep.subr.mxu0 0.0
  %76 = vmatpush1.xpose.msra.mxu0 %v39
  %77 = vmatprep.subr.mxu0 0.0
  %78 = vmatpush1.xpose.msra.mxu0 %v36
  %79 = vmatprep.subr.mxu0 0.0
  %80 = vmatpush2.xpose.msra.mxu0 0.0
  %81 = vmatprep.subr.mxu0 0.0
  %82 = vmatpush2.xpose.msra.mxu0 0.0
  %83 = vmatprep.subr.mxu0 0.0
  %84 = vmatpush2.xpose.msra.mxu0 0.0
  %85 = vmatprep.subr.mxu0 0.0
  %86 = vmatpush2.xpose.msra.mxu0 0.0
  %87 = vmatprep.subr.mxu0 0.0
  %88 = vmatpush2.xpose.msra.mxu0 0.0
  %89 = vmatprep.subr.mxu0 0.0
  %90 = vmatpush2.xpose.msra.mxu0 0.0
  %91 = vmatprep.subr.mxu0 0.0
  %92 = vmatpush2.xpose.msra.mxu0 0.0
  %93 = vmatprep.subr.mxu0 0.0
  %94 = vmatpush2.xpose.msra.mxu0 0.0
  %95 = vmatprep.subr.mxu0 0.0
  %96 = vmatpush2.xpose.msra.mxu0 0.0
  %97 = vmatprep.subr.mxu0 0.0
  %98 = vmatpush2.xpose.msra.mxu0 0.0
  %99 = vmatprep.subr.mxu0 0.0
  %100 = vmatpush2.xpose.msra.mxu0 0.0
  %101 = vmatprep.subr.mxu0 0.0
  %102 = vmatpush2.xpose.msra.mxu0 0.0
  %103 = vmatprep.subr.mxu0 0.0
  %104 = vmatpush2.xpose.msra.mxu0 0.0
  %105 = vmatprep.subr.mxu0 0.0
  %106 = vmatpush2.xpose.msra.mxu0 0.0
  %107 = vmatprep.subr.mxu0 0.0
  %108 = vmatpush2.xpose.msra.mxu0 0.0
  %109 = vmatprep.subr.mxu0 0.0
  %110 = vmatpush2.xpose.msra.mxu0 0.0
  %111 = vmatprep.mubr.f32.mxu0 0.0
  %112 = vmatmul.mubr.f32.gmra.mxu0 %v24
  %v113 = vpop.f32.mrf.mxu0
  %v114 = vadd.f32 0.0, %v113
  %v115 = vpop.f32.mrf.mxu0
  %116 = vmatprep.mubr.f32.mxu0 0.0
  %117 = vmatmul.mubr.f32.gmra.mxu0 %v27
  %v118 = vpop.f32.mrf.mxu0
  %v119 = vadd.f32 0.0, %v118
  %v120 = vpop.f32.mrf.mxu0
  %121 = vmatprep.mubr.f32.mxu0 0.0
  %122 = vmatmul.mubr.f32.gmra.mxu0 %v30
  %v123 = vpop.f32.mrf.mxu0
  %v124 = vadd.f32 0.0, %v123
  %v125 = vpop.f32.mrf.mxu0
  %126 = vmatprep.mubr.f32.mxu0 0.0
  %127 = vmatmul.mubr.f32.gmra.mxu0 %v33
  %v128 = vpop.f32.mrf.mxu0
  %v129 = vadd.f32 0.0, %v128
  %v130 = vpop.f32.mrf.mxu0
  %131 = vdwg.mxu0
  %vm132 = vcmask 261120
  %v133 = vsel %vm132, %v114, -inf
  %134 = vmax.xlane.f32.xlu0 %v133
  %v135 = vpop.xlane.xlu0 %134
  %v136 = vsel %vm132, %v119, -inf
  %137 = vmax.xlane.f32.xlu0 %v136
  %v138 = vpop.xlane.xlu0 %137
  %v139 = vsel %vm132, %v124, -inf
  %140 = vmax.xlane.f32.xlu0 %v139
  %v141 = vpop.xlane.xlu0 %140
  %v142 = vsel %vm132, %v129, -inf
  %143 = vmax.xlane.f32.xlu0 %v142
  %v144 = vpop.xlane.xlu0 %143
  %v145 = vsub.f32 %v114, %v135
  %v146 = vsub.f32 %v119, %v138
  %v147 = vsub.f32 %v124, %v141
  %v148 = vsub.f32 %v129, %v144
  %v149 = vmul.f32 %v145, 1.442695
  %v150 = vpow.pop %v149
  %v151 = vmul.f32 %v146, 1.442695
  %v152 = vpow.pop %v151
  %v153 = vmul.f32 %v147, 1.442695
  %v154 = vpow.pop %v153
  %v155 = vmul.f32 %v148, 1.442695
  %v156 = vpow.pop %v155
  %v157 = vsel %vm132, %v150, 0.0
  %158 = vadd.xlane.f32.xlu0 %v157
  %v159 = vpop.xlane.xlu0 %158
  %v160 = vsel %vm132, %v152, 0.0
  %161 = vadd.xlane.f32.xlu0 %v160
  %v162 = vpop.xlane.xlu0 %161
  %v163 = vsel %vm132, %v154, 0.0
  %164 = vadd.xlane.f32.xlu0 %v163
  %v165 = vpop.xlane.xlu0 %164
  %v166 = vsel %vm132, %v156, 0.0
  %167 = vadd.xlane.f32.xlu0 %v166
  %v168 = vpop.xlane.xlu0 %167
  %v169 = vrcp.pop %v159
  %v170 = vrcp.pop %v162
  %v171 = vrcp.pop %v165
  %v172 = vrcp.pop %v168
  %v173 = vmul.f32 %v150, %v169
  %v174 = vmul.f32 %v152, %v170
  %v175 = vmul.f32 %v154, %v171
  %v176 = vmul.f32 %v156, %v172
  %v177 = vld [vmem:[%s2] sm:$0xff]
  %v178 = vld [vmem:[%s2 + $0x8] sm:$0xff]
  %v179 = vld [vmem:[%s2 + $0x10] sm:$0xff]
  %v180 = vld [vmem:[%s2 + $0x18] sm:$0xff]
  %v181 = vld [vmem:[%s2 + $0x20] sm:$0xff]
  %v182 = vld [vmem:[%s2 + $0x28] sm:$0xff]
  %v183 = vld [vmem:[%s2 + $0x30] sm:$0xff]
  %v184 = vld [vmem:[%s2 + $0x38] sm:$0xff]
  %vm185 = vcmask 130048
  %v187 = vsel %vm185, %v177, 0
  %v190 = vsel %vm185, %v178, 0
  %v193 = vsel %vm185, %v179, 0
  %v196 = vsel %vm185, %v180, 0
  %v199 = vsel %vm185, %v181, 0
  %v202 = vsel %vm185, %v182, 0
  %v205 = vsel %vm185, %v183, 0
  %v208 = vsel %vm185, %v184, 0
  %v211 = vsel %vm185, %v173, 0
  %v214 = vsel %vm185, %v174, 0
  %v217 = vsel %vm185, %v175, 0
  %v220 = vsel %vm185, %v176, 0
  %222 = vmatprep.subr.mxu0 0.0
  %223 = vmatpush1.xpose.msra.mxu0 0.0
  %224 = vmatprep.subr.mxu0 0.0
  %225 = vmatpush1.xpose.msra.mxu0 0.0
  %226 = vmatprep.subr.mxu0 0.0
  %227 = vmatpush1.xpose.msra.mxu0 0.0
  %228 = vmatprep.subr.mxu0 0.0
  %229 = vmatpush1.xpose.msra.mxu0 0.0
  %230 = vmatprep.subr.mxu0 0.0
  %231 = vmatpush1.xpose.msra.mxu0 0.0
  %232 = vmatprep.subr.mxu0 0.0
  %233 = vmatpush1.xpose.msra.mxu0 0.0
  %234 = vmatprep.subr.mxu0 0.0
  %235 = vmatpush1.xpose.msra.mxu0 0.0
  %236 = vmatprep.subr.mxu0 0.0
  %237 = vmatpush1.xpose.msra.mxu0 0.0
  %238 = vmatprep.subr.mxu0 0.0
  %239 = vmatpush1.xpose.msra.mxu0 0.0
  %240 = vmatprep.subr.mxu0 0.0
  %241 = vmatpush1.xpose.msra.mxu0 0.0
  %242 = vmatprep.subr.mxu0 0.0
  %243 = vmatpush1.xpose.msra.mxu0 0.0
  %244 = vmatprep.subr.mxu0 0.0
  %245 = vmatpush1.xpose.msra.mxu0 0.0
  %246 = vmatprep.subr.mxu0 0.0
  %247 = vmatpush1.xpose.msra.mxu0 %v220
  %248 = vmatprep.subr.mxu0 0.0
  %249 = vmatpush1.xpose.msra.mxu0 %v217
  %250 = vmatprep.subr.mxu0 0.0
  %251 = vmatpush1.xpose.msra.mxu0 %v214
  %252 = vmatprep.subr.mxu0 0.0
  %253 = vmatpush1.xpose.msra.mxu0 %v211
  %254 = vmatprep.subr.mxu0 0.0
  %255 = vmatpush2.xpose.msra.mxu0 0.0
  %256 = vmatprep.subr.mxu0 0.0
  %257 = vmatpush2.xpose.msra.mxu0 0.0
  %258 = vmatprep.subr.mxu0 0.0
  %259 = vmatpush2.xpose.msra.mxu0 0.0
  %260 = vmatprep.subr.mxu0 0.0
  %261 = vmatpush2.xpose.msra.mxu0 0.0
  %262 = vmatprep.subr.mxu0 0.0
  %263 = vmatpush2.xpose.msra.mxu0 0.0
  %264 = vmatprep.subr.mxu0 0.0
  %265 = vmatpush2.xpose.msra.mxu0 0.0
  %266 = vmatprep.subr.mxu0 0.0
  %267 = vmatpush2.xpose.msra.mxu0 0.0
  %268 = vmatprep.subr.mxu0 0.0
  %269 = vmatpush2.xpose.msra.mxu0 0.0
  %270 = vmatprep.subr.mxu0 0.0
  %271 = vmatpush2.xpose.msra.mxu0 0.0
  %272 = vmatprep.subr.mxu0 0.0
  %273 = vmatpush2.xpose.msra.mxu0 0.0
  %274 = vmatprep.subr.mxu0 0.0
  %275 = vmatpush2.xpose.msra.mxu0 0.0
  %276 = vmatprep.subr.mxu0 0.0
  %277 = vmatpush2.xpose.msra.mxu0 0.0
  %278 = vmatprep.subr.mxu0 0.0
  %279 = vmatpush2.xpose.msra.mxu0 0.0
  %280 = vmatprep.subr.mxu0 0.0
  %281 = vmatpush2.xpose.msra.mxu0 0.0
  %282 = vmatprep.subr.mxu0 0.0
  %283 = vmatpush2.xpose.msra.mxu0 0.0
  %284 = vmatprep.subr.mxu0 0.0
  %285 = vmatpush2.xpose.msra.mxu0 0.0
  %286 = vmatprep.mubr.f32.mxu0 0.0
  %287 = vmatmul.mubr.f32.gmra.mxu0 %v187
  %v288 = vpop.f32.mrf.mxu0
  %v289 = vadd.f32 0.0, %v288
  %v290 = vpop.f32.mrf.mxu0
  %291 = vmatprep.mubr.f32.mxu0 0.0
  %292 = vmatmul.mubr.f32.gmra.mxu0 %v190
  %v293 = vpop.f32.mrf.mxu0
  %v294 = vadd.f32 0.0, %v293
  %v295 = vpop.f32.mrf.mxu0
  %296 = vmatprep.mubr.f32.mxu0 0.0
  %297 = vmatmul.mubr.f32.gmra.mxu0 %v193
  %v298 = vpop.f32.mrf.mxu0
  %v299 = vadd.f32 0.0, %v298
  %v300 = vpop.f32.mrf.mxu0
  %301 = vmatprep.mubr.f32.mxu0 0.0
  %302 = vmatmul.mubr.f32.gmra.mxu0 %v196
  %v303 = vpop.f32.mrf.mxu0
  %v304 = vadd.f32 0.0, %v303
  %v305 = vpop.f32.mrf.mxu0
  %306 = vmatprep.mubr.f32.mxu0 0.0
  %307 = vmatmul.mubr.f32.gmra.mxu0 %v199
  %v308 = vpop.f32.mrf.mxu0
  %v309 = vadd.f32 0.0, %v308
  %v310 = vpop.f32.mrf.mxu0
  %311 = vmatprep.mubr.f32.mxu0 0.0
  %312 = vmatmul.mubr.f32.gmra.mxu0 %v202
  %v313 = vpop.f32.mrf.mxu0
  %v314 = vadd.f32 0.0, %v313
  %v315 = vpop.f32.mrf.mxu0
  %316 = vmatprep.mubr.f32.mxu0 0.0
  %317 = vmatmul.mubr.f32.gmra.mxu0 %v205
  %v318 = vpop.f32.mrf.mxu0
  %v319 = vadd.f32 0.0, %v318
  %v320 = vpop.f32.mrf.mxu0
  %321 = vmatprep.mubr.f32.mxu0 0.0
  %322 = vmatmul.mubr.f32.gmra.mxu0 %v208
  %v323 = vpop.f32.mrf.mxu0
  %v324 = vadd.f32 0.0, %v323
  %v325 = vpop.f32.mrf.mxu0
  %326 = vdwg.mxu0
  %327 = vst.msk [vmem:[%s3] sm:$0xff] %vm132, %v289
  %328 = vst.msk [vmem:[%s3 + $0x8] sm:$0xff] %vm132, %v294
  %329 = vst.msk [vmem:[%s3 + $0x10] sm:$0xff] %vm132, %v299
  %330 = vst.msk [vmem:[%s3 + $0x18] sm:$0xff] %vm132, %v304
  %331 = vst.msk [vmem:[%s3 + $0x20] sm:$0xff] %vm132, %v309
  %332 = vst.msk [vmem:[%s3 + $0x28] sm:$0xff] %vm132, %v314
  %333 = vst.msk [vmem:[%s3 + $0x30] sm:$0xff] %vm132, %v319
  %334 = vst.msk [vmem:[%s3 + $0x38] sm:$0xff] %vm132, %v324
  %335 = vrot.lane.b32.xlu0 %v173, 112
  %v336 = vpop.permute.xlu0 %335
  %337 = vrot.lane.b32.xlu0 %v174, 112
  %v338 = vpop.permute.xlu0 %337
  %339 = vrot.lane.b32.xlu0 %v175, 112
  %v340 = vpop.permute.xlu0 %339
  %341 = vrot.lane.b32.xlu0 %v176, 112
  %v342 = vpop.permute.xlu0 %341
  %v343 = vsel %vm185, %v336, 0
  %v345 = vsel %vm185, %v338, 0
  %v347 = vsel %vm185, %v340, 0
  %v349 = vsel %vm185, %v342, 0
  %351 = vmatprep.subr.mxu0 0.0
  %352 = vmatpush1.xpose.msra.mxu0 0.0
  %353 = vmatprep.subr.mxu0 0.0
  %354 = vmatpush1.xpose.msra.mxu0 0.0
  %355 = vmatprep.subr.mxu0 0.0
  %356 = vmatpush1.xpose.msra.mxu0 0.0
  %357 = vmatprep.subr.mxu0 0.0
  %358 = vmatpush1.xpose.msra.mxu0 0.0
  %359 = vmatprep.subr.mxu0 0.0
  %360 = vmatpush1.xpose.msra.mxu0 0.0
  %361 = vmatprep.subr.mxu0 0.0
  %362 = vmatpush1.xpose.msra.mxu0 0.0
  %363 = vmatprep.subr.mxu0 0.0
  %364 = vmatpush1.xpose.msra.mxu0 0.0
  %365 = vmatprep.subr.mxu0 0.0
  %366 = vmatpush1.xpose.msra.mxu0 0.0
  %367 = vmatprep.subr.mxu0 0.0
  %368 = vmatpush1.xpose.msra.mxu0 0.0
  %369 = vmatprep.subr.mxu0 0.0
  %370 = vmatpush1.xpose.msra.mxu0 0.0
  %371 = vmatprep.subr.mxu0 0.0
  %372 = vmatpush1.xpose.msra.mxu0 0.0
  %373 = vmatprep.subr.mxu0 0.0
  %374 = vmatpush1.xpose.msra.mxu0 0.0
  %375 = vmatprep.subr.mxu0 0.0
  %376 = vmatpush1.xpose.msra.mxu0 %v349
  %377 = vmatprep.subr.mxu0 0.0
  %378 = vmatpush1.xpose.msra.mxu0 %v347
  %379 = vmatprep.subr.mxu0 0.0
  %380 = vmatpush1.xpose.msra.mxu0 %v345
  %381 = vmatprep.subr.mxu0 0.0
  %382 = vmatpush1.xpose.msra.mxu0 %v343
  %383 = vmatprep.subr.mxu0 0.0
  %384 = vmatpush2.xpose.msra.mxu0 0.0
  %385 = vmatprep.subr.mxu0 0.0
  %386 = vmatpush2.xpose.msra.mxu0 0.0
  %387 = vmatprep.subr.mxu0 0.0
  %388 = vmatpush2.xpose.msra.mxu0 0.0
  %389 = vmatprep.subr.mxu0 0.0
  %390 = vmatpush2.xpose.msra.mxu0 0.0
  %391 = vmatprep.subr.mxu0 0.0
  %392 = vmatpush2.xpose.msra.mxu0 0.0
  %393 = vmatprep.subr.mxu0 0.0
  %394 = vmatpush2.xpose.msra.mxu0 0.0
  %395 = vmatprep.subr.mxu0 0.0
  %396 = vmatpush2.xpose.msra.mxu0 0.0
  %397 = vmatprep.subr.mxu0 0.0
  %398 = vmatpush2.xpose.msra.mxu0 0.0
  %399 = vmatprep.subr.mxu0 0.0
  %400 = vmatpush2.xpose.msra.mxu0 0.0
  %401 = vmatprep.subr.mxu0 0.0
  %402 = vmatpush2.xpose.msra.mxu0 0.0
  %403 = vmatprep.subr.mxu0 0.0
  %404 = vmatpush2.xpose.msra.mxu0 0.0
  %405 = vmatprep.subr.mxu0 0.0
  %406 = vmatpush2.xpose.msra.mxu0 0.0
  %407 = vmatprep.subr.mxu0 0.0
  %408 = vmatpush2.xpose.msra.mxu0 0.0
  %409 = vmatprep.subr.mxu0 0.0
  %410 = vmatpush2.xpose.msra.mxu0 0.0
  %411 = vmatprep.subr.mxu0 0.0
  %412 = vmatpush2.xpose.msra.mxu0 0.0
  %413 = vmatprep.subr.mxu0 0.0
  %414 = vmatpush2.xpose.msra.mxu0 0.0
  %415 = vmatprep.mubr.f32.mxu0 0.0
  %416 = vmatmul.mubr.f32.gmra.mxu0 %v187
  %v417 = vpop.f32.mrf.mxu0
  %v418 = vadd.f32 0.0, %v417
  %v419 = vpop.f32.mrf.mxu0
  %420 = vmatprep.mubr.f32.mxu0 0.0
  %421 = vmatmul.mubr.f32.gmra.mxu0 %v190
  %v422 = vpop.f32.mrf.mxu0
  %v423 = vadd.f32 0.0, %v422
  %v424 = vpop.f32.mrf.mxu0
  %425 = vmatprep.mubr.f32.mxu0 0.0
  %426 = vmatmul.mubr.f32.gmra.mxu0 %v193
  %v427 = vpop.f32.mrf.mxu0
  %v428 = vadd.f32 0.0, %v427
  %v429 = vpop.f32.mrf.mxu0
  %430 = vmatprep.mubr.f32.mxu0 0.0
  %431 = vmatmul.mubr.f32.gmra.mxu0 %v196
  %v432 = vpop.f32.mrf.mxu0
  %v433 = vadd.f32 0.0, %v432
  %v434 = vpop.f32.mrf.mxu0
  %435 = vmatprep.mubr.f32.mxu0 0.0
  %436 = vmatmul.mubr.f32.gmra.mxu0 %v199
  %v437 = vpop.f32.mrf.mxu0
  %v438 = vadd.f32 0.0, %v437
  %v439 = vpop.f32.mrf.mxu0
  %440 = vmatprep.mubr.f32.mxu0 0.0
  %441 = vmatmul.mubr.f32.gmra.mxu0 %v202
  %v442 = vpop.f32.mrf.mxu0
  %v443 = vadd.f32 0.0, %v442
  %v444 = vpop.f32.mrf.mxu0
  %445 = vmatprep.mubr.f32.mxu0 0.0
  %446 = vmatmul.mubr.f32.gmra.mxu0 %v205
  %v447 = vpop.f32.mrf.mxu0
  %v448 = vadd.f32 0.0, %v447
  %v449 = vpop.f32.mrf.mxu0
  %450 = vmatprep.mubr.f32.mxu0 0.0
  %451 = vmatmul.mubr.f32.gmra.mxu0 %v208
  %v452 = vpop.f32.mrf.mxu0
  %v453 = vadd.f32 0.0, %v452
  %v454 = vpop.f32.mrf.mxu0
  %455 = vdwg.mxu0
  %s456 = scalar_lea.vmem %s3, 64
  %457 = vst.msk [vmem:[%s456] sm:$0xff] %vm132, %v418
  %458 = vst.msk [vmem:[%s456 + $0x8] sm:$0xff] %vm132, %v423
  %459 = vst.msk [vmem:[%s456 + $0x10] sm:$0xff] %vm132, %v428
  %460 = vst.msk [vmem:[%s456 + $0x18] sm:$0xff] %vm132, %v433
  %461 = vst.msk [vmem:[%s456 + $0x20] sm:$0xff] %vm132, %v438
  %462 = vst.msk [vmem:[%s456 + $0x28] sm:$0xff] %vm132, %v443
  %463 = vst.msk [vmem:[%s456 + $0x30] sm:$0xff] %vm132, %v448
  %464 = vst.msk [vmem:[%s456 + $0x38] sm:$0xff] %vm132, %v453
  // Predicated region
  $region14: #{_lambda_.5} parent=0 // pred_check
    _
  $region15: #{_lambda_.5} parent=0 // pred_check_branch
    %466 = sbr.rel (0) target = $region17
  $region16: #{_lambda_.5} parent=0 // pred_region
    _
  $region17: #{_lambda_.5} parent=0 // pred_fallthru
    _
  // Predicated region
  $region18: #{_lambda_.5} parent=0 // pred_check
    _
  $region19: #{_lambda_.5} parent=0 // pred_check_branch
    %468 = sbr.rel (0) target = $region21
  $region20: #{_lambda_.5} parent=0 // pred_region
    _
  $region21: #{_lambda_.5} parent=0 // pred_fallthru
    _

</llo_original>
